<compile_context>
chip_gen: v7x
topology: tpu7x:2x2x1
jax: 0.10.0
libtpu: 0.0.40
codegen_flags: <defaults>
</compile_context>

<pallas_src>
import jax
import jax.numpy as jnp
from jax.experimental import pallas as pl
from jax.experimental.pallas import tpu as pltpu


def _leaky_relu(h, slope=0.2):
    # max(h, slope*h) == LeakyReLU for 0 < slope < 1 (mul + max, 2 VALU ops).
    return jnp.maximum(h, slope * h)


def lmapping_kernel(x_ref, z_ref, w1_ref, w2_ref, wz_ref, w3_ref, w4_ref, o_ref):
    cdt = w1_ref.dtype                       # matmul-input dtype (f32 or bf16)
    x = x_ref[...].astype(cdt)

    # block(nROI -> nROI/2): Linear(bias=False) + LeakyReLU(0.2)
    h = jnp.dot(x, w1_ref[...], preferred_element_type=jnp.float32)
    h = _leaky_relu(h)

    # block(nROI/2 -> nROI/4)
    h = jnp.dot(h.astype(cdt), w2_ref[...], preferred_element_type=jnp.float32)
    h = _leaky_relu(h)

    # Sub_Adder product layer: h * (z @ Wz).
    n_pattern = z_ref.shape[1]
    if n_pattern <= 8:
        # Tiny K = nPattern: compute the projection on the VPU as nPattern
        # broadcast FMAs (static unroll) instead of an MXU round-trip on the
        # serial dependency chain.
        z = z_ref[...].astype(jnp.float32)
        wz = wz_ref[...].astype(jnp.float32)   # (nPattern, nROI/4), tiny
        zm = z[:, 0:1] * wz[0:1, :]
        for k in range(1, n_pattern):          # static Python unroll
            zm = zm + z[:, k:k + 1] * wz[k:k + 1, :]
    else:
        # Larger nPattern: one small matmul beats a long VPU unroll.
        zm = jnp.dot(z_ref[...].astype(cdt), wz_ref[...],
                     preferred_element_type=jnp.float32)
    h = h * zm

    # block(nROI/4 -> nROI/2)
    h = jnp.dot(h.astype(cdt), w3_ref[...], preferred_element_type=jnp.float32)
    h = _leaky_relu(h)

    # block(nROI/2 -> nROI)
    h = jnp.dot(h.astype(cdt), w4_ref[...], preferred_element_type=jnp.float32)
    h = _leaky_relu(h)

    o_ref[...] = h.astype(o_ref.dtype)


def _choose_batch_tile(B):
    """Single tile for small B; otherwise 2-8 large, balanced tiles."""
    if B <= 2048:
        return B                       # one tile: no step overhead
    # Even grid count (v7x two-TC balance); tiles capped at ~4096 rows so a
    # double-buffered f32 x/out tile pair is only ~4 MiB at nROI=64.
    grid_b = 2
    while (B + grid_b - 1) // grid_b > 4096:
        grid_b += 2
    tb = (B + grid_b - 1) // grid_b
    return (tb + 7) // 8 * 8           # sublane-aligned


def lmapping_generator(x, z, params, *, tb=None):
    """x: (B, nROI), z: (B, nPattern). params: dict of pre-transposed weights."""
    B, nROI = x.shape
    _, nPattern = z.shape
    w1t, w2t, wzt, w3t, w4t = (params["w1t"], params["w2t"], params["wzt"],
                               params["w3t"], params["w4t"])

    if tb is None:
        tb = _choose_batch_tile(B)

    # Pad batch to a multiple of the tile (glue outside the kernel).
    grid_b = pl.cdiv(B, tb)
    Bp = grid_b * tb
    if Bp != B:
        pad = Bp - B
        x = jnp.pad(x, ((0, pad), (0, 0)))
        z = jnp.pad(z, ((0, pad), (0, 0)))

    def weight_spec(w):
        # Full weight resident in VMEM for every batch tile (constant index_map
        # -> no per-step weight DMA).
        return pl.BlockSpec(w.shape, lambda i: (0, 0))

    # VMEM budget: weights + double-buffered x/z/out tiles + 4 MiB margin,
    # capped at 32 MiB (v7x physical VMEM is only 64 MiB).
    weight_bytes = sum(int(w.size) * jnp.dtype(w.dtype).itemsize
                       for w in (w1t, w2t, wzt, w3t, w4t))
    x_bytes = tb * nROI * jnp.dtype(x.dtype).itemsize
    z_bytes = tb * nPattern * jnp.dtype(z.dtype).itemsize
    o_bytes = tb * nROI * jnp.dtype(x.dtype).itemsize
    need = weight_bytes + 2 * (x_bytes + z_bytes + o_bytes) + (4 << 20)
    vmem_limit = int(min(max(need, 8 << 20), 32 << 20))

    out = pl.pallas_call(
        lmapping_kernel,
        out_shape=jax.ShapeDtypeStruct((Bp, nROI), x.dtype),
        grid_spec=pl.GridSpec(
            grid=(grid_b,),
            in_specs=[
                pl.BlockSpec((tb, nROI), lambda i: (i, 0)),
                pl.BlockSpec((tb, nPattern), lambda i: (i, 0)),
                weight_spec(w1t),
                weight_spec(w2t),
                weight_spec(wzt),
                weight_spec(w3t),
                weight_spec(w4t),
            ],
            out_specs=pl.BlockSpec((tb, nROI), lambda i: (i, 0)),
        ),
        compiler_params=pltpu.CompilerParams(
            dimension_semantics=("parallel",),
            vmem_limit_bytes=vmem_limit),
    )(x, z, w1t, w2t, wzt, w3t, w4t)

    return out[:B] if Bp != B else out


def init_params(key, nROI, nPattern, dtype=jnp.float32):
    """Deterministic init, PyTorch-Linear-style uniform(-1/sqrt(fan_in), +).

    Use dtype=jnp.bfloat16 on v5e/v6e/v7x to halve weight/activation DMA bytes
    (accumulation and elementwise math stay f32 inside the kernel).
    """
    h2, h4 = nROI // 2, nROI // 4
    ks = jax.random.split(key, 5)

    def linear_w(k, out_f, in_f):
        bound = 1.0 / jnp.sqrt(in_f)
        return jax.random.uniform(k, (out_f, in_f), jnp.float32,
                                  -bound, bound).astype(dtype)

    w1 = linear_w(ks[0], h2, nROI)      # nROI   -> nROI/2
    w2 = linear_w(ks[1], h4, h2)        # nROI/2 -> nROI/4
    wz = linear_w(ks[2], h4, nPattern)  # Sub_Adder: nPattern -> nROI/4
    w3 = linear_w(ks[3], h2, h4)        # nROI/4 -> nROI/2
    w4 = linear_w(ks[4], nROI, h2)      # nROI/2 -> nROI
    # pre-transpose (glue, outside the kernel) so kernel matmuls are row-major
    return {"w1t": w1.T, "w2t": w2.T, "wzt": wz.T, "w3t": w3.T, "w4t": w4.T}


def reference_forward(x, z, p):
    lrelu = lambda h: jnp.where(h > 0, h, 0.2 * h)
    f32 = lambda a: a.astype(jnp.float32)
    h = lrelu(f32(x) @ f32(p["w1t"]))
    h = lrelu(h @ f32(p["w2t"]))
    h = h * (f32(z) @ f32(p["wzt"]))
    h = lrelu(h @ f32(p["w3t"]))
    h = lrelu(h @ f32(p["w4t"]))
    return h.astype(x.dtype)


if __name__ == "__main__":
    nROI, nPattern, batch = 64, 4, 256
    key = jax.random.PRNGKey(0)
    kx, kz, kp = jax.random.split(key, 3)

    x = jax.random.normal(kx, (batch, nROI), jnp.float32)
    z = jax.random.uniform(kz, (batch, nPattern), jnp.float32)
    params = init_params(kp, nROI, nPattern, dtype=jnp.float32)

    ref = reference_forward(x, z, params)

    # Default path: B <= 2048 -> one tile, single grid step.
    out = jax.block_until_ready(lmapping_generator(x, z, params))
    assert out.shape == (batch, nROI)
    assert jnp.allclose(out, ref, atol=1e-5, rtol=1e-5)

    # Multi-tile + padding path (tb=96 -> grid_b=3, batch padded 256 -> 288).
    out_tiled = jax.block_until_ready(lmapping_generator(x, z, params, tb=96))
    assert out_tiled.shape == (batch, nROI)
    assert jnp.allclose(out_tiled, ref, atol=1e-5, rtol=1e-5)

    # bf16-I/O path (weights + x/z/out bf16 at the boundary, f32 accumulation
    # and f32 elementwise inside): halves HBM bytes on the mem-bound path.
    params_bf16 = jax.tree_util.tree_map(lambda w: w.astype(jnp.bfloat16), params)
    out_bf16 = jax.block_until_ready(
        lmapping_generator(x.astype(jnp.bfloat16), z.astype(jnp.bfloat16),
                           params_bf16))
    assert out_bf16.shape == (batch, nROI) and out_bf16.dtype == jnp.bfloat16
    assert jnp.allclose(out_bf16.astype(jnp.float32), ref, atol=1e-1, rtol=1e-1)

    print("KERNEL_OK")
</pallas_src>

<mosaic_0001>
module attributes {stable_mosaic.version = 11 : i64} {
  func.func @lmapping_kernel(%arg0: i32, %arg1: memref<256x64xf32, #tpu.memory_space<vmem>>, %arg2: memref<256x4xf32, #tpu.memory_space<vmem>>, %arg3: memref<64x32xf32, #tpu.memory_space<vmem>>, %arg4: memref<32x16xf32, #tpu.memory_space<vmem>>, %arg5: memref<4x16xf32, #tpu.memory_space<vmem>>, %arg6: memref<16x32xf32, #tpu.memory_space<vmem>>, %arg7: memref<32x64xf32, #tpu.memory_space<vmem>>, %arg8: memref<256x64xf32, #tpu.memory_space<vmem>>) attributes {dimension_semantics = [#tpu.dimension_semantics<parallel>], iteration_bounds = array<i64: 1>, scalar_prefetch = 0 : i64, scratch_operands = 0 : i64, tpu.core_type = #tpu.core_type<tc>, window_params = [{transform_indices = @transform_0, window_bounds = array<i64: 256, 64>}, {transform_indices = @transform_1, window_bounds = array<i64: 256, 4>}, {pipeline_mode = #tpu.pipeline_mode<synchronous>, transform_indices = @transform_2, window_bounds = array<i64: 64, 32>}, {pipeline_mode = #tpu.pipeline_mode<synchronous>, transform_indices = @transform_3, window_bounds = array<i64: 32, 16>}, {pipeline_mode = #tpu.pipeline_mode<synchronous>, transform_indices = @transform_4, window_bounds = array<i64: 4, 16>}, {pipeline_mode = #tpu.pipeline_mode<synchronous>, transform_indices = @transform_5, window_bounds = array<i64: 16, 32>}, {pipeline_mode = #tpu.pipeline_mode<synchronous>, transform_indices = @transform_6, window_bounds = array<i64: 32, 64>}, {transform_indices = @transform_7, window_bounds = array<i64: 256, 64>}]} {
    %c0 = arith.constant 0 : index
    %c0_0 = arith.constant 0 : index
    %0 = vector.load %arg1[%c0, %c0_0] : memref<256x64xf32, #tpu.memory_space<vmem>>, vector<256x64xf32>
    %c0_1 = arith.constant 0 : index
    %c0_2 = arith.constant 0 : index
    %1 = vector.load %arg3[%c0_1, %c0_2] : memref<64x32xf32, #tpu.memory_space<vmem>>, vector<64x32xf32>
    %cst = arith.constant dense<0.000000e+00> : vector<256x32xf32>
    %2 = tpu.matmul %0, %1, %cst {dimension_numbers = #tpu.dot_dimension_numbers<[1], [0], [0], [1], [0, 0, 1, 1], [], []>} : vector<256x64xf32>, vector<64x32xf32>, vector<256x32xf32> -> vector<256x32xf32>
    %cst_3 = arith.constant 2.000000e-01 : f32
    %3 = vector.broadcast %cst_3 : f32 to vector<256x32xf32>
    %4 = arith.mulf %3, %2 : vector<256x32xf32>
    %5 = arith.maximumf %2, %4 : vector<256x32xf32>
    %c0_4 = arith.constant 0 : index
    %c0_5 = arith.constant 0 : index
    %6 = vector.load %arg4[%c0_4, %c0_5] : memref<32x16xf32, #tpu.memory_space<vmem>>, vector<32x16xf32>
    %cst_6 = arith.constant dense<0.000000e+00> : vector<256x16xf32>
    %7 = tpu.matmul %5, %6, %cst_6 {dimension_numbers = #tpu.dot_dimension_numbers<[1], [0], [0], [1], [0, 0, 1, 1], [], []>} : vector<256x32xf32>, vector<32x16xf32>, vector<256x16xf32> -> vector<256x16xf32>
    %cst_7 = arith.constant 2.000000e-01 : f32
    %8 = vector.broadcast %cst_7 : f32 to vector<256x16xf32>
    %9 = arith.mulf %8, %7 : vector<256x16xf32>
    %10 = arith.maximumf %7, %9 : vector<256x16xf32>
    %c0_8 = arith.constant 0 : index
    %c0_9 = arith.constant 0 : index
    %11 = vector.load %arg2[%c0_8, %c0_9] : memref<256x4xf32, #tpu.memory_space<vmem>>, vector<256x4xf32>
    %c0_10 = arith.constant 0 : index
    %c0_11 = arith.constant 0 : index
    %12 = vector.load %arg5[%c0_10, %c0_11] : memref<4x16xf32, #tpu.memory_space<vmem>>, vector<4x16xf32>
    %13 = vector.extract_strided_slice %11 {offsets = [0, 0], sizes = [256, 1], strides = [1, 1]} : vector<256x4xf32> to vector<256x1xf32>
    %14 = vector.extract_strided_slice %12 {offsets = [0, 0], sizes = [1, 16], strides = [1, 1]} : vector<4x16xf32> to vector<1x16xf32>
    %15 = vector.broadcast %13 : vector<256x1xf32> to vector<256x16xf32>
    %16 = vector.broadcast %14 : vector<1x16xf32> to vector<256x16xf32>
    %17 = arith.mulf %15, %16 : vector<256x16xf32>
    %18 = vector.extract_strided_slice %11 {offsets = [0, 1], sizes = [256, 1], strides = [1, 1]} : vector<256x4xf32> to vector<256x1xf32>
    %19 = vector.extract_strided_slice %12 {offsets = [1, 0], sizes = [1, 16], strides = [1, 1]} : vector<4x16xf32> to vector<1x16xf32>
    %20 = vector.broadcast %18 : vector<256x1xf32> to vector<256x16xf32>
    %21 = vector.broadcast %19 : vector<1x16xf32> to vector<256x16xf32>
    %22 = arith.mulf %20, %21 : vector<256x16xf32>
    %23 = arith.addf %17, %22 : vector<256x16xf32>
    %24 = vector.extract_strided_slice %11 {offsets = [0, 2], sizes = [256, 1], strides = [1, 1]} : vector<256x4xf32> to vector<256x1xf32>
    %25 = vector.extract_strided_slice %12 {offsets = [2, 0], sizes = [1, 16], strides = [1, 1]} : vector<4x16xf32> to vector<1x16xf32>
    %26 = vector.broadcast %24 : vector<256x1xf32> to vector<256x16xf32>
    %27 = vector.broadcast %25 : vector<1x16xf32> to vector<256x16xf32>
    %28 = arith.mulf %26, %27 : vector<256x16xf32>
    %29 = arith.addf %23, %28 : vector<256x16xf32>
    %30 = vector.extract_strided_slice %11 {offsets = [0, 3], sizes = [256, 1], strides = [1, 1]} : vector<256x4xf32> to vector<256x1xf32>
    %31 = vector.extract_strided_slice %12 {offsets = [3, 0], sizes = [1, 16], strides = [1, 1]} : vector<4x16xf32> to vector<1x16xf32>
    %32 = vector.broadcast %30 : vector<256x1xf32> to vector<256x16xf32>
    %33 = vector.broadcast %31 : vector<1x16xf32> to vector<256x16xf32>
    %34 = arith.mulf %32, %33 : vector<256x16xf32>
    %35 = arith.addf %29, %34 : vector<256x16xf32>
    %36 = arith.mulf %10, %35 : vector<256x16xf32>
    %c0_12 = arith.constant 0 : index
    %c0_13 = arith.constant 0 : index
    %37 = vector.load %arg6[%c0_12, %c0_13] : memref<16x32xf32, #tpu.memory_space<vmem>>, vector<16x32xf32>
    %cst_14 = arith.constant dense<0.000000e+00> : vector<256x32xf32>
    %38 = tpu.matmul %36, %37, %cst_14 {dimension_numbers = #tpu.dot_dimension_numbers<[1], [0], [0], [1], [0, 0, 1, 1], [], []>} : vector<256x16xf32>, vector<16x32xf32>, vector<256x32xf32> -> vector<256x32xf32>
    %cst_15 = arith.constant 2.000000e-01 : f32
    %39 = vector.broadcast %cst_15 : f32 to vector<256x32xf32>
    %40 = arith.mulf %39, %38 : vector<256x32xf32>
    %41 = arith.maximumf %38, %40 : vector<256x32xf32>
    %c0_16 = arith.constant 0 : index
    %c0_17 = arith.constant 0 : index
    %42 = vector.load %arg7[%c0_16, %c0_17] : memref<32x64xf32, #tpu.memory_space<vmem>>, vector<32x64xf32>
    %cst_18 = arith.constant dense<0.000000e+00> : vector<256x64xf32>
    %43 = tpu.matmul %41, %42, %cst_18 {dimension_numbers = #tpu.dot_dimension_numbers<[1], [0], [0], [1], [0, 0, 1, 1], [], []>} : vector<256x32xf32>, vector<32x64xf32>, vector<256x64xf32> -> vector<256x64xf32>
    %cst_19 = arith.constant 2.000000e-01 : f32
    %44 = vector.broadcast %cst_19 : f32 to vector<256x64xf32>
    %45 = arith.mulf %44, %43 : vector<256x64xf32>
    %46 = arith.maximumf %43, %45 : vector<256x64xf32>
    %c0_20 = arith.constant 0 : index
    %c0_21 = arith.constant 0 : index
    %47 = vector.load %arg8[%c0_20, %c0_21] : memref<256x64xf32, #tpu.memory_space<vmem>>, vector<256x64xf32>
    tpu.vector_store %arg8[%c0_20, %c0_21], %46 {strides = array<i32>} : memref<256x64xf32, #tpu.memory_space<vmem>>, vector<256x64xf32>,
    return
  }
  func.func @transform_0(%arg0: i32) -> (i32, i32) {
    %c0_i32 = arith.constant 0 : i32
    %c0_i32_0 = arith.constant 0 : i32
    return %arg0, %c0_i32 : i32, i32
  }
  func.func @transform_1(%arg0: i32) -> (i32, i32) {
    %c0_i32 = arith.constant 0 : i32
    %c0_i32_0 = arith.constant 0 : i32
    return %arg0, %c0_i32 : i32, i32
  }
  func.func @transform_2(%arg0: i32) -> (i32, i32) {
    %c0_i32 = arith.constant 0 : i32
    %c0_i32_0 = arith.constant 0 : i32
    %c0_i32_1 = arith.constant 0 : i32
    return %c0_i32, %c0_i32_0 : i32, i32
  }
  func.func @transform_3(%arg0: i32) -> (i32, i32) {
    %c0_i32 = arith.constant 0 : i32
    %c0_i32_0 = arith.constant 0 : i32
    %c0_i32_1 = arith.constant 0 : i32
    return %c0_i32, %c0_i32_0 : i32, i32
  }
  func.func @transform_4(%arg0: i32) -> (i32, i32) {
    %c0_i32 = arith.constant 0 : i32
    %c0_i32_0 = arith.constant 0 : i32
    %c0_i32_1 = arith.constant 0 : i32
    return %c0_i32, %c0_i32_0 : i32, i32
  }
  func.func @transform_5(%arg0: i32) -> (i32, i32) {
    %c0_i32 = arith.constant 0 : i32
    %c0_i32_0 = arith.constant 0 : i32
    %c0_i32_1 = arith.constant 0 : i32
    return %c0_i32, %c0_i32_0 : i32, i32
  }
  func.func @transform_6(%arg0: i32) -> (i32, i32) {
    %c0_i32 = arith.constant 0 : i32
    %c0_i32_0 = arith.constant 0 : i32
    %c0_i32_1 = arith.constant 0 : i32
    return %c0_i32, %c0_i32_0 : i32, i32
  }
  func.func @transform_7(%arg0: i32) -> (i32, i32) {
    %c0_i32 = arith.constant 0 : i32
    %c0_i32_0 = arith.constant 0 : i32
    return %arg0, %c0_i32 : i32, i32
  }
}

</mosaic_0001>

<llo_original>
// kernel: tpu_custom_call.1
$region0: #{tpu_custom_call.1}
  #allocation0 [shape = 'u32[]', space=smem, size = 0x4, offset = 0x4, fixed_abs, tag = 'smem constant byte address 0x4 - core index']
  #allocation1 [shape = 'u32[144,128]{1,0:T(1,128)}', space=vmem, size = 0x12000, scoped, tag = 'internal scratch']
  %s0 = inlined_call_operand.vmem [shape: f32[256,64], index: 0, kind: input, shape index: {}]
  %s1 = inlined_call_operand.vmem [shape: f32[256,4], index: 1, kind: input, shape index: {}]
  %s2 = inlined_call_operand.vmem [shape: f32[64,32], index: 2, kind: input, shape index: {}]
  %s3 = inlined_call_operand.vmem [shape: f32[32,16], index: 3, kind: input, shape index: {}]
  %s4 = inlined_call_operand.vmem [shape: f32[4,16], index: 4, kind: input, shape index: {}]
  %s5 = inlined_call_operand.vmem [shape: f32[16,32], index: 5, kind: input, shape index: {}]
  %s6 = inlined_call_operand.vmem [shape: f32[32,64], index: 6, kind: input, shape index: {}]
  %s7 = inlined_call_operand.vmem [shape: f32[256,64], index: 7, kind: output, shape index: {}]
  %s8 = sld [smem:[#allocation0]]
  $region38: #{tpu_custom_call.1} parent=0
    _
  %s10 = ssub.s32 1, %s8
  %s11 = scalar_select 0, %s10, %s8
  // Predicated region
  $region2: #{tpu_custom_call.1} parent=0 // pred_check
    _
  $region3: #{tpu_custom_call.1} parent=0 // pred_check_branch
    %13 = sbr.rel (0) target = $region5
  $region4: #{tpu_custom_call.1} parent=0 // pred_region
    _
  $region5: #{tpu_custom_call.1} parent=0 // pred_fallthru
    _
  // Predicated region
  $region6: #{tpu_custom_call.1} parent=0 // pred_check
    _
  $region7: #{tpu_custom_call.1} parent=0 // pred_check_branch
    %15 = sbr.rel (0) target = $region9
  $region8: #{tpu_custom_call.1} parent=0 // pred_region
    _
  $region9: #{tpu_custom_call.1} parent=0 // pred_fallthru
    _
  // Predicated region
  $region10: #{tpu_custom_call.1} parent=0 // pred_check
    _
  $region11: #{tpu_custom_call.1} parent=0 // pred_check_branch
    %17 = sbr.rel (0) target = $region13
  $region12: #{tpu_custom_call.1} parent=0 // pred_region
    _
  $region13: #{tpu_custom_call.1} parent=0 // pred_fallthru
    _
  // Predicated region
  $region14: #{tpu_custom_call.1} parent=0 // pred_check
    _
  $region15: #{tpu_custom_call.1} parent=0 // pred_check_branch
    %19 = sbr.rel (0) target = $region17
  $region16: #{tpu_custom_call.1} parent=0 // pred_region
    _
  $region17: #{tpu_custom_call.1} parent=0 // pred_fallthru
    _
  // Predicated region
  $region18: #{tpu_custom_call.1} parent=0 // pred_check
    _
  $region19: #{tpu_custom_call.1} parent=0 // pred_check_branch
    %21 = sbr.rel (0) target = $region21
  $region20: #{tpu_custom_call.1} parent=0 // pred_region
    _
  $region21: #{tpu_custom_call.1} parent=0 // pred_fallthru
    _
  // Predicated region
  $region22: #{tpu_custom_call.1} parent=0 // pred_check
    _
  $region23: #{tpu_custom_call.1} parent=0 // pred_check_branch
    %23 = sbr.rel (0) target = $region25
  $region24: #{tpu_custom_call.1} parent=0 // pred_region
    _
  $region25: #{tpu_custom_call.1} parent=0 // pred_fallthru
    _
  // Predicated region
  $region26: #{tpu_custom_call.1} parent=0 // pred_check
    _
  $region27: #{tpu_custom_call.1} parent=0 // pred_check_branch
    %25 = sbr.rel (0) target = $region29
  $region28: #{tpu_custom_call.1} parent=0 // pred_region
    _
  $region29: #{tpu_custom_call.1} parent=0 // pred_fallthru
    _
  %v26 = vld [vmem:[%s0] sm:$0xff]
  %v27 = vld [vmem:[%s0 + $0x8] sm:$0xff]
  %v28 = vld [vmem:[%s0 + $0x10] sm:$0xff]
  %v29 = vld [vmem:[%s0 + $0x18] sm:$0xff]
  %v30 = vld [vmem:[%s0 + $0x20] sm:$0xff]
  %v31 = vld [vmem:[%s0 + $0x28] sm:$0xff]
  %v32 = vld [vmem:[%s0 + $0x30] sm:$0xff]
  %v33 = vld [vmem:[%s0 + $0x38] sm:$0xff]
  %v34 = vld [vmem:[%s0 + $0x40] sm:$0xff]
  %v35 = vld [vmem:[%s0 + $0x48] sm:$0xff]
  %v36 = vld [vmem:[%s0 + $0x50] sm:$0xff]
  %v37 = vld [vmem:[%s0 + $0x58] sm:$0xff]
  %v38 = vld [vmem:[%s0 + $0x60] sm:$0xff]
  %v39 = vld [vmem:[%s0 + $0x68] sm:$0xff]
  %v40 = vld [vmem:[%s0 + $0x70] sm:$0xff]
  %v41 = vld [vmem:[%s0 + $0x78] sm:$0xff]
  %v42 = vld [vmem:[%s0 + $0x80] sm:$0xff]
  %v43 = vld [vmem:[%s0 + $0x88] sm:$0xff]
  %v44 = vld [vmem:[%s0 + $0x90] sm:$0xff]
  %v45 = vld [vmem:[%s0 + $0x98] sm:$0xff]
  %v46 = vld [vmem:[%s0 + $0xa0] sm:$0xff]
  %v47 = vld [vmem:[%s0 + $0xa8] sm:$0xff]
  %v48 = vld [vmem:[%s0 + $0xb0] sm:$0xff]
  %v49 = vld [vmem:[%s0 + $0xb8] sm:$0xff]
  %v50 = vld [vmem:[%s0 + $0xc0] sm:$0xff]
  %v51 = vld [vmem:[%s0 + $0xc8] sm:$0xff]
  %v52 = vld [vmem:[%s0 + $0xd0] sm:$0xff]
  %v53 = vld [vmem:[%s0 + $0xd8] sm:$0xff]
  %v54 = vld [vmem:[%s0 + $0xe0] sm:$0xff]
  %v55 = vld [vmem:[%s0 + $0xe8] sm:$0xff]
  %v56 = vld [vmem:[%s0 + $0xf0] sm:$0xff]
  %v57 = vld [vmem:[%s0 + $0xf8] sm:$0xff]
  %v58 = vld [vmem:[%s2] sm:$0xff]
  %v59 = vld [vmem:[%s2 + $0x8] sm:$0xff]
  %v60 = vld [vmem:[%s2 + $0x10] sm:$0xff]
  %v61 = vld [vmem:[%s2 + $0x18] sm:$0xff]
  %v62 = vld [vmem:[%s2 + $0x20] sm:$0xff]
  %v63 = vld [vmem:[%s2 + $0x28] sm:$0xff]
  %v64 = vld [vmem:[%s2 + $0x30] sm:$0xff]
  %v65 = vld [vmem:[%s2 + $0x38] sm:$0xff]
  %vm66 = vcmask 523264
  %v68 = vsel %vm66, %v26, 0
  %v71 = vsel %vm66, %v27, 0
  %v74 = vsel %vm66, %v28, 0
  %v77 = vsel %vm66, %v29, 0
  %v80 = vsel %vm66, %v30, 0
  %v83 = vsel %vm66, %v31, 0
  %v86 = vsel %vm66, %v32, 0
  %v89 = vsel %vm66, %v33, 0
  %v92 = vsel %vm66, %v34, 0
  %v95 = vsel %vm66, %v35, 0
  %v98 = vsel %vm66, %v36, 0
  %v101 = vsel %vm66, %v37, 0
  %v104 = vsel %vm66, %v38, 0
  %v107 = vsel %vm66, %v39, 0
  %v110 = vsel %vm66, %v40, 0
  %v113 = vsel %vm66, %v41, 0
  %v116 = vsel %vm66, %v42, 0
  %v119 = vsel %vm66, %v43, 0
  %v122 = vsel %vm66, %v44, 0
  %v125 = vsel %vm66, %v45, 0
  %v128 = vsel %vm66, %v46, 0
  %v131 = vsel %vm66, %v47, 0
  %v134 = vsel %vm66, %v48, 0
  %v137 = vsel %vm66, %v49, 0
  %v140 = vsel %vm66, %v50, 0
  %v143 = vsel %vm66, %v51, 0
  %v146 = vsel %vm66, %v52, 0
  %v149 = vsel %vm66, %v53, 0
  %v152 = vsel %vm66, %v54, 0
  %v155 = vsel %vm66, %v55, 0
  %v158 = vsel %vm66, %v56, 0
  %v161 = vsel %vm66, %v57, 0
  %163 = vmatprep.subr.mxu0 0.0
  %164 = vmatpush1.msra.mxu0 %v58
  %165 = vmatprep.subr.mxu0 0.0
  %166 = vmatpush1.msra.mxu0 %v59
  %167 = vmatprep.subr.mxu0 0.0
  %168 = vmatpush1.msra.mxu0 %v60
  %169 = vmatprep.subr.mxu0 0.0
  %170 = vmatpush1.msra.mxu0 %v61
  %171 = vmatprep.subr.mxu0 0.0
  %172 = vmatpush1.msra.mxu0 %v62
  %173 = vmatprep.subr.mxu0 0.0
  %174 = vmatpush1.msra.mxu0 %v63
  %175 = vmatprep.subr.mxu0 0.0
  %176 = vmatpush1.msra.mxu0 %v64
  %177 = vmatprep.subr.mxu0 0.0
  %178 = vmatpush1.msra.mxu0 %v65
  %179 = vmatprep.subr.mxu0 0.0
  %180 = vmatpush1.msra.mxu0 0.0
  %181 = vmatprep.subr.mxu0 0.0
  %182 = vmatpush1.msra.mxu0 0.0
  %183 = vmatprep.subr.mxu0 0.0
  %184 = vmatpush1.msra.mxu0 0.0
  %185 = vmatprep.subr.mxu0 0.0
  %186 = vmatpush1.msra.mxu0 0.0
  %187 = vmatprep.subr.mxu0 0.0
  %188 = vmatpush1.msra.mxu0 0.0
  %189 = vmatprep.subr.mxu0 0.0
  %190 = vmatpush1.msra.mxu0 0.0
  %191 = vmatprep.subr.mxu0 0.0
  %192 = vmatpush1.msra.mxu0 0.0
  %193 = vmatprep.subr.mxu0 0.0
  %194 = vmatpush1.msra.mxu0 0.0
  %195 = vmatprep.subr.mxu0 0.0
  %196 = vmatpush1.msra.mxu0 0.0
  %197 = vmatprep.subr.mxu0 0.0
  %198 = vmatpush1.msra.mxu0 0.0
  %199 = vmatprep.subr.mxu0 0.0
  %200 = vmatpush1.msra.mxu0 0.0
  %201 = vmatprep.subr.mxu0 0.0
  %202 = vmatpush1.msra.mxu0 0.0
  %203 = vmatprep.subr.mxu0 0.0
  %204 = vmatpush1.msra.mxu0 0.0
  %205 = vmatprep.subr.mxu0 0.0
  %206 = vmatpush1.msra.mxu0 0.0
  %207 = vmatprep.subr.mxu0 0.0
  %208 = vmatpush1.msra.mxu0 0.0
  %209 = vmatprep.subr.mxu0 0.0
  %210 = vmatpush1.msra.mxu0 0.0
  %211 = vmatprep.subr.mxu0 0.0
  %212 = vmatpush1.msra.mxu0 0.0
  %213 = vmatprep.subr.mxu0 0.0
  %214 = vmatpush1.msra.mxu0 0.0
  %215 = vmatprep.subr.mxu0 0.0
  %216 = vmatpush1.msra.mxu0 0.0
  %217 = vmatprep.subr.mxu0 0.0
  %218 = vmatpush1.msra.mxu0 0.0
  %219 = vmatprep.subr.mxu0 0.0
  %220 = vmatpush1.msra.mxu0 0.0
  %221 = vmatprep.subr.mxu0 0.0
  %222 = vmatpush1.msra.mxu0 0.0
  %223 = vmatprep.subr.mxu0 0.0
  %224 = vmatpush1.msra.mxu0 0.0
  %225 = vmatprep.subr.mxu0 0.0
  %226 = vmatpush1.msra.mxu0 0.0
  %227 = vmatprep.mubr.f32.mxu0 0.0
  %228 = vmatmul.mubr.f32.gmra.mrb[0].mxu0 %v68
  %v229 = vpop.f32.mrb[0].mxu0
  %v230 = vadd.f32 0.0, %v229
  %v231 = vpop.f32.mrb[0].mxu0
  %232 = vmatprep.mubr.f32.mxu0 0.0
  %233 = vmatmul.mubr.f32.gmra.mrb[0].mxu0 %v71
  %v234 = vpop.f32.mrb[0].mxu0
  %v235 = vadd.f32 0.0, %v234
  %v236 = vpop.f32.mrb[0].mxu0
  %237 = vmatprep.mubr.f32.mxu0 0.0
  %238 = vmatmul.mubr.f32.gmra.mrb[0].mxu0 %v74
  %v239 = vpop.f32.mrb[0].mxu0
  %v240 = vadd.f32 0.0, %v239
  %v241 = vpop.f32.mrb[0].mxu0
  %242 = vmatprep.mubr.f32.mxu0 0.0
  %243 = vmatmul.mubr.f32.gmra.mrb[0].mxu0 %v77
  %v244 = vpop.f32.mrb[0].mxu0
  %v245 = vadd.f32 0.0, %v244
  %v246 = vpop.f32.mrb[0].mxu0
  %247 = vmatprep.mubr.f32.mxu0 0.0
  %248 = vmatmul.mubr.f32.gmra.mrb[0].mxu0 %v80
  %v249 = vpop.f32.mrb[0].mxu0
  %v250 = vadd.f32 0.0, %v249
  %v251 = vpop.f32.mrb[0].mxu0
  %252 = vmatprep.mubr.f32.mxu0 0.0
  %253 = vmatmul.mubr.f32.gmra.mrb[0].mxu0 %v83
  %v254 = vpop.f32.mrb[0].mxu0
  %v255 = vadd.f32 0.0, %v254
  %v256 = vpop.f32.mrb[0].mxu0
  %257 = vmatprep.mubr.f32.mxu0 0.0
  %258 = vmatmul.mubr.f32.gmra.mrb[0].mxu0 %v86
  %v259 = vpop.f32.mrb[0].mxu0
  %v260 = vadd.f32 0.0, %v259
  %v261 = vpop.f32.mrb[0].mxu0
  %262 = vmatprep.mubr.f32.mxu0 0.0
  %263 = vmatmul.mubr.f32.gmra.mrb[0].mxu0 %v89
  %v264 = vpop.f32.mrb[0].mxu0
  %v265 = vadd.f32 0.0, %v264
  %v266 = vpop.f32.mrb[0].mxu0
  %267 = vmatprep.mubr.f32.mxu0 0.0
  %268 = vmatmul.mubr.f32.gmra.mrb[0].mxu0 %v92
  %v269 = vpop.f32.mrb[0].mxu0
  %v270 = vadd.f32 0.0, %v269
  %v271 = vpop.f32.mrb[0].mxu0
  %272 = vmatprep.mubr.f32.mxu0 0.0
  %273 = vmatmul.mubr.f32.gmra.mrb[0].mxu0 %v95
  %v274 = vpop.f32.mrb[0].mxu0
  %v275 = vadd.f32 0.0, %v274
  %v276 = vpop.f32.mrb[0].mxu0
  %277 = vmatprep.mubr.f32.mxu0 0.0
  %278 = vmatmul.mubr.f32.gmra.mrb[0].mxu0 %v98
  %v279 = vpop.f32.mrb[0].mxu0
  %v280 = vadd.f32 0.0, %v279
  %v281 = vpop.f32.mrb[0].mxu0
  %282 = vmatprep.mubr.f32.mxu0 0.0
  %283 = vmatmul.mubr.f32.gmra.mrb[0].mxu0 %v101
  %v284 = vpop.f32.mrb[0].mxu0
  %v285 = vadd.f32 0.0, %v284
  %v286 = vpop.f32.mrb[0].mxu0
  %287 = vmatprep.mubr.f32.mxu0 0.0
  %288 = vmatmul.mubr.f32.gmra.mrb[0].mxu0 %v104
  %v289 = vpop.f32.mrb[0].mxu0
  %v290 = vadd.f32 0.0, %v289
  %v291 = vpop.f32.mrb[0].mxu0
  %292 = vmatprep.mubr.f32.mxu0 0.0
  %293 = vmatmul.mubr.f32.gmra.mrb[0].mxu0 %v107
  %v294 = vpop.f32.mrb[0].mxu0
  %v295 = vadd.f32 0.0, %v294
  %v296 = vpop.f32.mrb[0].mxu0
  %297 = vmatprep.mubr.f32.mxu0 0.0
  %298 = vmatmul.mubr.f32.gmra.mrb[0].mxu0 %v110
  %v299 = vpop.f32.mrb[0].mxu0
  %v300 = vadd.f32 0.0, %v299
  %v301 = vpop.f32.mrb[0].mxu0
  %302 = vmatprep.mubr.f32.mxu0 0.0
  %303 = vmatmul.mubr.f32.gmra.mrb[0].mxu0 %v113
  %v304 = vpop.f32.mrb[0].mxu0
  %v305 = vadd.f32 0.0, %v304
  %v306 = vpop.f32.mrb[0].mxu0
  %307 = vmatprep.mubr.f32.mxu0 0.0
  %308 = vmatmul.mubr.f32.gmra.mrb[0].mxu0 %v116
  %v309 = vpop.f32.mrb[0].mxu0
  %v310 = vadd.f32 0.0, %v309
  %v311 = vpop.f32.mrb[0].mxu0
  %312 = vmatprep.mubr.f32.mxu0 0.0
  %313 = vmatmul.mubr.f32.gmra.mrb[0].mxu0 %v119
  %v314 = vpop.f32.mrb[0].mxu0
  %v315 = vadd.f32 0.0, %v314
  %v316 = vpop.f32.mrb[0].mxu0
  %317 = vmatprep.mubr.f32.mxu0 0.0
  %318 = vmatmul.mubr.f32.gmra.mrb[0].mxu0 %v122
  %v319 = vpop.f32.mrb[0].mxu0
  %v320 = vadd.f32 0.0, %v319
  %v321 = vpop.f32.mrb[0].mxu0
  %322 = vmatprep.mubr.f32.mxu0 0.0
  %323 = vmatmul.mubr.f32.gmra.mrb[0].mxu0 %v125
  %v324 = vpop.f32.mrb[0].mxu0
  %v325 = vadd.f32 0.0, %v324
  %v326 = vpop.f32.mrb[0].mxu0
  %327 = vmatprep.mubr.f32.mxu0 0.0
  %328 = vmatmul.mubr.f32.gmra.mrb[0].mxu0 %v128
  %v329 = vpop.f32.mrb[0].mxu0
  %v330 = vadd.f32 0.0, %v329
  %v331 = vpop.f32.mrb[0].mxu0
  %332 = vmatprep.mubr.f32.mxu0 0.0
  %333 = vmatmul.mubr.f32.gmra.mrb[0].mxu0 %v131
  %v334 = vpop.f32.mrb[0].mxu0
  %v335 = vadd.f32 0.0, %v334
  %v336 = vpop.f32.mrb[0].mxu0
  %337 = vmatprep.mubr.f32.mxu0 0.0
  %338 = vmatmul.mubr.f32.gmra.mrb[0].mxu0 %v134
  %v339 = vpop.f32.mrb[0].mxu0
  %v340 = vadd.f32 0.0, %v339
  %v341 = vpop.f32.mrb[0].mxu0
  %342 = vmatprep.mubr.f32.mxu0 0.0
  %343 = vmatmul.mubr.f32.gmra.mrb[0].mxu0 %v137
  %v344 = vpop.f32.mrb[0].mxu0
  %v345 = vadd.f32 0.0, %v344
  %v346 = vpop.f32.mrb[0].mxu0
  %347 = vmatprep.mubr.f32.mxu0 0.0
  %348 = vmatmul.mubr.f32.gmra.mrb[0].mxu0 %v140
  %v349 = vpop.f32.mrb[0].mxu0
  %v350 = vadd.f32 0.0, %v349
  %v351 = vpop.f32.mrb[0].mxu0
  %352 = vmatprep.mubr.f32.mxu0 0.0
  %353 = vmatmul.mubr.f32.gmra.mrb[0].mxu0 %v143
  %v354 = vpop.f32.mrb[0].mxu0
  %v355 = vadd.f32 0.0, %v354
  %v356 = vpop.f32.mrb[0].mxu0
  %357 = vmatprep.mubr.f32.mxu0 0.0
  %358 = vmatmul.mubr.f32.gmra.mrb[0].mxu0 %v146
  %v359 = vpop.f32.mrb[0].mxu0
  %v360 = vadd.f32 0.0, %v359
  %v361 = vpop.f32.mrb[0].mxu0
  %362 = vmatprep.mubr.f32.mxu0 0.0
  %363 = vmatmul.mubr.f32.gmra.mrb[0].mxu0 %v149
  %v364 = vpop.f32.mrb[0].mxu0
  %v365 = vadd.f32 0.0, %v364
  %v366 = vpop.f32.mrb[0].mxu0
  %367 = vmatprep.mubr.f32.mxu0 0.0
  %368 = vmatmul.mubr.f32.gmra.mrb[0].mxu0 %v152
  %v369 = vpop.f32.mrb[0].mxu0
  %v370 = vadd.f32 0.0, %v369
  %v371 = vpop.f32.mrb[0].mxu0
  %372 = vmatprep.mubr.f32.mxu0 0.0
  %373 = vmatmul.mubr.f32.gmra.mrb[0].mxu0 %v155
  %v374 = vpop.f32.mrb[0].mxu0
  %v375 = vadd.f32 0.0, %v374
  %v376 = vpop.f32.mrb[0].mxu0
  %377 = vmatprep.mubr.f32.mxu0 0.0
  %378 = vmatmul.mubr.f32.gmra.mrb[0].mxu0 %v158
  %v379 = vpop.f32.mrb[0].mxu0
  %v380 = vadd.f32 0.0, %v379
  %v381 = vpop.f32.mrb[0].mxu0
  %382 = vmatprep.mubr.f32.mxu0 0.0
  %383 = vmatmul.mubr.f32.gmra.mrb[0].mxu0 %v161
  %v384 = vpop.f32.mrb[0].mxu0
  %v385 = vadd.f32 0.0, %v384
  %v386 = vpop.f32.mrb[0].mxu0
  %387 = vdwg.mxu0
  %v388 = vmul.f32 %v230, 0.2
  %v389 = vmul.f32 %v235, 0.2
  %v390 = vmul.f32 %v240, 0.2
  %v391 = vmul.f32 %v245, 0.2
  %v392 = vmul.f32 %v250, 0.2
  %v393 = vmul.f32 %v255, 0.2
  %v394 = vmul.f32 %v260, 0.2
  %v395 = vmul.f32 %v265, 0.2
  %v396 = vmul.f32 %v270, 0.2
  %v397 = vmul.f32 %v275, 0.2
  %v398 = vmul.f32 %v280, 0.2
  %v399 = vmul.f32 %v285, 0.2
  %v400 = vmul.f32 %v290, 0.2
  %v401 = vmul.f32 %v295, 0.2
  %v402 = vmul.f32 %v300, 0.2
  %v403 = vmul.f32 %v305, 0.2
  %v404 = vmul.f32 %v310, 0.2
  %v405 = vmul.f32 %v315, 0.2
  %v406 = vmul.f32 %v320, 0.2
  %v407 = vmul.f32 %v325, 0.2
  %v408 = vmul.f32 %v330, 0.2
  %v409 = vmul.f32 %v335, 0.2
  %v410 = vmul.f32 %v340, 0.2
  %v411 = vmul.f32 %v345, 0.2
  %v412 = vmul.f32 %v350, 0.2
  %v413 = vmul.f32 %v355, 0.2
  %v414 = vmul.f32 %v360, 0.2
  %v415 = vmul.f32 %v365, 0.2
  %v416 = vmul.f32 %v370, 0.2
  %v417 = vmul.f32 %v375, 0.2
  %v418 = vmul.f32 %v380, 0.2
  %v419 = vmul.f32 %v385, 0.2
  %v420 = vmax.f32 %v230, %v388
  %v421 = vmax.f32 %v235, %v389
  %v422 = vmax.f32 %v240, %v390
  %v423 = vmax.f32 %v245, %v391
  %v424 = vmax.f32 %v250, %v392
  %v425 = vmax.f32 %v255, %v393
  %v426 = vmax.f32 %v260, %v394
  %v427 = vmax.f32 %v265, %v395
  %v428 = vmax.f32 %v270, %v396
  %v429 = vmax.f32 %v275, %v397
  %v430 = vmax.f32 %v280, %v398
  %v431 = vmax.f32 %v285, %v399
  %v432 = vmax.f32 %v290, %v400
  %v433 = vmax.f32 %v295, %v401
  %v434 = vmax.f32 %v300, %v402
  %v435 = vmax.f32 %v305, %v403
  %v436 = vmax.f32 %v310, %v404
  %v437 = vmax.f32 %v315, %v405
  %v438 = vmax.f32 %v320, %v406
  %v439 = vmax.f32 %v325, %v407
  %v440 = vmax.f32 %v330, %v408
  %v441 = vmax.f32 %v335, %v409
  %v442 = vmax.f32 %v340, %v410
  %v443 = vmax.f32 %v345, %v411
  %v444 = vmax.f32 %v350, %v412
  %v445 = vmax.f32 %v355, %v413
  %v446 = vmax.f32 %v360, %v414
  %v447 = vmax.f32 %v365, %v415
  %v448 = vmax.f32 %v370, %v416
  %v449 = vmax.f32 %v375, %v417
  %v450 = vmax.f32 %v380, %v418
  %v451 = vmax.f32 %v385, %v419
  %v452 = vld [vmem:[%s3] sm:$0xff]
  %v453 = vld [vmem:[%s3 + $0x8] sm:$0xff]
  %v454 = vld [vmem:[%s3 + $0x10] sm:$0xff]
  %v455 = vld [vmem:[%s3 + $0x18] sm:$0xff]
  %vm456 = vcmask 261120
  %v458 = vsel %vm456, %v420, 0
  %v461 = vsel %vm456, %v421, 0
  %v464 = vsel %vm456, %v422, 0
  %v467 = vsel %vm456, %v423, 0
  %v470 = vsel %vm456, %v424, 0
  %v473 = vsel %vm456, %v425, 0
  %v476 = vsel %vm456, %v426, 0
  %v479 = vsel %vm456, %v427, 0
  %v482 = vsel %vm456, %v428, 0
  %v485 = vsel %vm456, %v429, 0
  %v488 = vsel %vm456, %v430, 0
  %v491 = vsel %vm456, %v431, 0
  %v494 = vsel %vm456, %v432, 0
  %v497 = vsel %vm456, %v433, 0
  %v500 = vsel %vm456, %v434, 0
  %v503 = vsel %vm456, %v435, 0
  %v506 = vsel %vm456, %v436, 0
  %v509 = vsel %vm456, %v437, 0
  %v512 = vsel %vm456, %v438, 0
  %v515 = vsel %vm456, %v439, 0
  %v518 = vsel %vm456, %v440, 0
  %v521 = vsel %vm456, %v441, 0
  %v524 = vsel %vm456, %v442, 0
  %v527 = vsel %vm456, %v443, 0
  %v530 = vsel %vm456, %v444, 0
  %v533 = vsel %vm456, %v445, 0
  %v536 = vsel %vm456, %v446, 0
  %v539 = vsel %vm456, %v447, 0
  %v542 = vsel %vm456, %v448, 0
  %v545 = vsel %vm456, %v449, 0
  %v548 = vsel %vm456, %v450, 0
  %v551 = vsel %vm456, %v451, 0
  %553 = vmatprep.subr.mxu0 0.0
  %554 = vmatpush1.msra.mxu0 %v452
  %555 = vmatprep.subr.mxu0 0.0
  %556 = vmatpush1.msra.mxu0 %v453
  %557 = vmatprep.subr.mxu0 0.0
  %558 = vmatpush1.msra.mxu0 %v454
  %559 = vmatprep.subr.mxu0 0.0
  %560 = vmatpush1.msra.mxu0 %v455
  %561 = vmatprep.subr.mxu0 0.0
  %562 = vmatpush1.msra.mxu0 0.0
  %563 = vmatprep.subr.mxu0 0.0
  %564 = vmatpush1.msra.mxu0 0.0
  %565 = vmatprep.subr.mxu0 0.0
  %566 = vmatpush1.msra.mxu0 0.0
  %567 = vmatprep.subr.mxu0 0.0
  %568 = vmatpush1.msra.mxu0 0.0
  %569 = vmatprep.subr.mxu0 0.0
  %570 = vmatpush1.msra.mxu0 0.0
  %571 = vmatprep.subr.mxu0 0.0
  %572 = vmatpush1.msra.mxu0 0.0
  %573 = vmatprep.subr.mxu0 0.0
  %574 = vmatpush1.msra.mxu0 0.0
  %575 = vmatprep.subr.mxu0 0.0
  %576 = vmatpush1.msra.mxu0 0.0
  %577 = vmatprep.subr.mxu0 0.0
  %578 = vmatpush1.msra.mxu0 0.0
  %579 = vmatprep.subr.mxu0 0.0
  %580 = vmatpush1.msra.mxu0 0.0
  %581 = vmatprep.subr.mxu0 0.0
  %582 = vmatpush1.msra.mxu0 0.0
  %583 = vmatprep.subr.mxu0 0.0
  %584 = vmatpush1.msra.mxu0 0.0
  %585 = vmatprep.subr.mxu0 0.0
  %586 = vmatpush1.msra.mxu0 0.0
  %587 = vmatprep.subr.mxu0 0.0
  %588 = vmatpush1.msra.mxu0 0.0
  %589 = vmatprep.subr.mxu0 0.0
  %590 = vmatpush1.msra.mxu0 0.0
  %591 = vmatprep.subr.mxu0 0.0
  %592 = vmatpush1.msra.mxu0 0.0
  %593 = vmatprep.subr.mxu0 0.0
  %594 = vmatpush1.msra.mxu0 0.0
  %595 = vmatprep.subr.mxu0 0.0
  %596 = vmatpush1.msra.mxu0 0.0
  %597 = vmatprep.subr.mxu0 0.0
  %598 = vmatpush1.msra.mxu0 0.0
  %599 = vmatprep.subr.mxu0 0.0
  %600 = vmatpush1.msra.mxu0 0.0
  %601 = vmatprep.subr.mxu0 0.0
  %602 = vmatpush1.msra.mxu0 0.0
  %603 = vmatprep.subr.mxu0 0.0
  %604 = vmatpush1.msra.mxu0 0.0
  %605 = vmatprep.subr.mxu0 0.0
  %606 = vmatpush1.msra.mxu0 0.0
  %607 = vmatprep.subr.mxu0 0.0
  %608 = vmatpush1.msra.mxu0 0.0
  %609 = vmatprep.subr.mxu0 0.0
  %610 = vmatpush1.msra.mxu0 0.0
  %611 = vmatprep.subr.mxu0 0.0
  %612 = vmatpush1.msra.mxu0 0.0
  %613 = vmatprep.subr.mxu0 0.0
  %614 = vmatpush1.msra.mxu0 0.0
  %615 = vmatprep.subr.mxu0 0.0
  %616 = vmatpush1.msra.mxu0 0.0
  %617 = vmatprep.mubr.f32.mxu0 0.0
  %618 = vmatmul.mubr.f32.gmra.mrb[0].mxu0 %v458
  %v619 = vpop.f32.mrb[0].mxu0
  %v620 = vadd.f32 0.0, %v619
  %v621 = vpop.f32.mrb[0].mxu0
  %622 = vmatprep.mubr.f32.mxu0 0.0
  %623 = vmatmul.mubr.f32.gmra.mrb[0].mxu0 %v461
  %v624 = vpop.f32.mrb[0].mxu0
  %v625 = vadd.f32 0.0, %v624
  %v626 = vpop.f32.mrb[0].mxu0
  %627 = vmatprep.mubr.f32.mxu0 0.0
  %628 = vmatmul.mubr.f32.gmra.mrb[0].mxu0 %v464
  %v629 = vpop.f32.mrb[0].mxu0
  %v630 = vadd.f32 0.0, %v629
  %v631 = vpop.f32.mrb[0].mxu0
  %632 = vmatprep.mubr.f32.mxu0 0.0
  %633 = vmatmul.mubr.f32.gmra.mrb[0].mxu0 %v467
  %v634 = vpop.f32.mrb[0].mxu0
  %v635 = vadd.f32 0.0, %v634
  %v636 = vpop.f32.mrb[0].mxu0
  %637 = vmatprep.mubr.f32.mxu0 0.0
  %638 = vmatmul.mubr.f32.gmra.mrb[0].mxu0 %v470
  %v639 = vpop.f32.mrb[0].mxu0
  %v640 = vadd.f32 0.0, %v639
  %v641 = vpop.f32.mrb[0].mxu0
  %642 = vmatprep.mubr.f32.mxu0 0.0
  %643 = vmatmul.mubr.f32.gmra.mrb[0].mxu0 %v473
  %v644 = vpop.f32.mrb[0].mxu0
  %v645 = vadd.f32 0.0, %v644
  %v646 = vpop.f32.mrb[0].mxu0
  %647 = vmatprep.mubr.f32.mxu0 0.0
  %648 = vmatmul.mubr.f32.gmra.mrb[0].mxu0 %v476
  %v649 = vpop.f32.mrb[0].mxu0
  %v650 = vadd.f32 0.0, %v649
  %v651 = vpop.f32.mrb[0].mxu0
  %652 = vmatprep.mubr.f32.mxu0 0.0
  %653 = vmatmul.mubr.f32.gmra.mrb[0].mxu0 %v479
  %v654 = vpop.f32.mrb[0].mxu0
  %v655 = vadd.f32 0.0, %v654
  %v656 = vpop.f32.mrb[0].mxu0
  %657 = vmatprep.mubr.f32.mxu0 0.0
  %658 = vmatmul.mubr.f32.gmra.mrb[0].mxu0 %v482
  %v659 = vpop.f32.mrb[0].mxu0
  %v660 = vadd.f32 0.0, %v659
  %v661 = vpop.f32.mrb[0].mxu0
  %662 = vmatprep.mubr.f32.mxu0 0.0
  %663 = vmatmul.mubr.f32.gmra.mrb[0].mxu0 %v485
  %v664 = vpop.f32.mrb[0].mxu0
  %v665 = vadd.f32 0.0, %v664
  %v666 = vpop.f32.mrb[0].mxu0
  %667 = vmatprep.mubr.f32.mxu0 0.0
  %668 = vmatmul.mubr.f32.gmra.mrb[0].mxu0 %v488
  %v669 = vpop.f32.mrb[0].mxu0
  %v670 = vadd.f32 0.0, %v669
  %v671 = vpop.f32.mrb[0].mxu0
  %672 = vmatprep.mubr.f32.mxu0 0.0
  %673 = vmatmul.mubr.f32.gmra.mrb[0].mxu0 %v491
  %v674 = vpop.f32.mrb[0].mxu0
  %v675 = vadd.f32 0.0, %v674
  %v676 = vpop.f32.mrb[0].mxu0
  %677 = vmatprep.mubr.f32.mxu0 0.0
  %678 = vmatmul.mubr.f32.gmra.mrb[0].mxu0 %v494
  %v679 = vpop.f32.mrb[0].mxu0
  %v680 = vadd.f32 0.0, %v679
  %v681 = vpop.f32.mrb[0].mxu0
  %682 = vmatprep.mubr.f32.mxu0 0.0
  %683 = vmatmul.mubr.f32.gmra.mrb[0].mxu0 %v497
  %v684 = vpop.f32.mrb[0].mxu0
  %v685 = vadd.f32 0.0, %v684
  %v686 = vpop.f32.mrb[0].mxu0
  %687 = vmatprep.mubr.f32.mxu0 0.0
  %688 = vmatmul.mubr.f32.gmra.mrb[0].mxu0 %v500
  %v689 = vpop.f32.mrb[0].mxu0
  %v690 = vadd.f32 0.0, %v689
  %v691 = vpop.f32.mrb[0].mxu0
  %692 = vmatprep.mubr.f32.mxu0 0.0
  %693 = vmatmul.mubr.f32.gmra.mrb[0].mxu0 %v503
  %v694 = vpop.f32.mrb[0].mxu0
  %v695 = vadd.f32 0.0, %v694
  %v696 = vpop.f32.mrb[0].mxu0
  %697 = vmatprep.mubr.f32.mxu0 0.0
  %698 = vmatmul.mubr.f32.gmra.mrb[0].mxu0 %v506
  %v699 = vpop.f32.mrb[0].mxu0
  %v700 = vadd.f32 0.0, %v699
  %v701 = vpop.f32.mrb[0].mxu0
  %702 = vmatprep.mubr.f32.mxu0 0.0
  %703 = vmatmul.mubr.f32.gmra.mrb[0].mxu0 %v509
  %v704 = vpop.f32.mrb[0].mxu0
  %v705 = vadd.f32 0.0, %v704
  %v706 = vpop.f32.mrb[0].mxu0
  %707 = vmatprep.mubr.f32.mxu0 0.0
  %708 = vmatmul.mubr.f32.gmra.mrb[0].mxu0 %v512
  %v709 = vpop.f32.mrb[0].mxu0
  %v710 = vadd.f32 0.0, %v709
  %v711 = vpop.f32.mrb[0].mxu0
  %712 = vmatprep.mubr.f32.mxu0 0.0
  %713 = vmatmul.mubr.f32.gmra.mrb[0].mxu0 %v515
  %v714 = vpop.f32.mrb[0].mxu0
  %v715 = vadd.f32 0.0, %v714
  %v716 = vpop.f32.mrb[0].mxu0
  %717 = vmatprep.mubr.f32.mxu0 0.0
  %718 = vmatmul.mubr.f32.gmra.mrb[0].mxu0 %v518
  %v719 = vpop.f32.mrb[0].mxu0
  %v720 = vadd.f32 0.0, %v719
  %v721 = vpop.f32.mrb[0].mxu0
  %722 = vmatprep.mubr.f32.mxu0 0.0
  %723 = vmatmul.mubr.f32.gmra.mrb[0].mxu0 %v521
  %v724 = vpop.f32.mrb[0].mxu0
  %v725 = vadd.f32 0.0, %v724
  %v726 = vpop.f32.mrb[0].mxu0
  %727 = vmatprep.mubr.f32.mxu0 0.0
  %728 = vmatmul.mubr.f32.gmra.mrb[0].mxu0 %v524
  %v729 = vpop.f32.mrb[0].mxu0
  %v730 = vadd.f32 0.0, %v729
  %v731 = vpop.f32.mrb[0].mxu0
  %732 = vmatprep.mubr.f32.mxu0 0.0
  %733 = vmatmul.mubr.f32.gmra.mrb[0].mxu0 %v527
  %v734 = vpop.f32.mrb[0].mxu0
  %v735 = vadd.f32 0.0, %v734
  %v736 = vpop.f32.mrb[0].mxu0
  %737 = vmatprep.mubr.f32.mxu0 0.0
  %738 = vmatmul.mubr.f32.gmra.mrb[0].mxu0 %v530
  %v739 = vpop.f32.mrb[0].mxu0
  %v740 = vadd.f32 0.0, %v739
  %v741 = vpop.f32.mrb[0].mxu0
  %742 = vmatprep.mubr.f32.mxu0 0.0
  %743 = vmatmul.mubr.f32.gmra.mrb[0].mxu0 %v533
  %v744 = vpop.f32.mrb[0].mxu0
  %v745 = vadd.f32 0.0, %v744
  %v746 = vpop.f32.mrb[0].mxu0
  %747 = vmatprep.mubr.f32.mxu0 0.0
  %748 = vmatmul.mubr.f32.gmra.mrb[0].mxu0 %v536
  %v749 = vpop.f32.mrb[0].mxu0
  %v750 = vadd.f32 0.0, %v749
  %v751 = vpop.f32.mrb[0].mxu0
  %752 = vmatprep.mubr.f32.mxu0 0.0
  %753 = vmatmul.mubr.f32.gmra.mrb[0].mxu0 %v539
  %v754 = vpop.f32.mrb[0].mxu0
  %v755 = vadd.f32 0.0, %v754
  %v756 = vpop.f32.mrb[0].mxu0
  %757 = vmatprep.mubr.f32.mxu0 0.0
  %758 = vmatmul.mubr.f32.gmra.mrb[0].mxu0 %v542
  %v759 = vpop.f32.mrb[0].mxu0
  %v760 = vadd.f32 0.0, %v759
  %v761 = vpop.f32.mrb[0].mxu0
  %762 = vmatprep.mubr.f32.mxu0 0.0
  %763 = vmatmul.mubr.f32.gmra.mrb[0].mxu0 %v545
  %v764 = vpop.f32.mrb[0].mxu0
  %v765 = vadd.f32 0.0, %v764
  %v766 = vpop.f32.mrb[0].mxu0
  %767 = vmatprep.mubr.f32.mxu0 0.0
  %768 = vmatmul.mubr.f32.gmra.mrb[0].mxu0 %v548
  %v769 = vpop.f32.mrb[0].mxu0
  %v770 = vadd.f32 0.0, %v769
  %v771 = vpop.f32.mrb[0].mxu0
  %772 = vmatprep.mubr.f32.mxu0 0.0
  %773 = vmatmul.mubr.f32.gmra.mrb[0].mxu0 %v551
  %v774 = vpop.f32.mrb[0].mxu0
  %v775 = vadd.f32 0.0, %v774
  %v776 = vpop.f32.mrb[0].mxu0
  %777 = vdwg.mxu0
  %v778 = vmul.f32 %v620, 0.2
  %v779 = vmul.f32 %v625, 0.2
  %v780 = vmul.f32 %v630, 0.2
  %v781 = vmul.f32 %v635, 0.2
  %v782 = vmul.f32 %v640, 0.2
  %v783 = vmul.f32 %v645, 0.2
  %v784 = vmul.f32 %v650, 0.2
  %v785 = vmul.f32 %v655, 0.2
  %v786 = vmul.f32 %v660, 0.2
  %v787 = vmul.f32 %v665, 0.2
  %v788 = vmul.f32 %v670, 0.2
  %v789 = vmul.f32 %v675, 0.2
  %v790 = vmul.f32 %v680, 0.2
  %v791 = vmul.f32 %v685, 0.2
  %v792 = vmul.f32 %v690, 0.2
  %v793 = vmul.f32 %v695, 0.2
  %v794 = vmul.f32 %v700, 0.2
  %v795 = vmul.f32 %v705, 0.2
  %v796 = vmul.f32 %v710, 0.2
  %v797 = vmul.f32 %v715, 0.2
  %v798 = vmul.f32 %v720, 0.2
  %v799 = vmul.f32 %v725, 0.2
  %v800 = vmul.f32 %v730, 0.2
  %v801 = vmul.f32 %v735, 0.2
  %v802 = vmul.f32 %v740, 0.2
  %v803 = vmul.f32 %v745, 0.2
  %v804 = vmul.f32 %v750, 0.2
  %v805 = vmul.f32 %v755, 0.2
  %v806 = vmul.f32 %v760, 0.2
  %v807 = vmul.f32 %v765, 0.2
  %v808 = vmul.f32 %v770, 0.2
  %v809 = vmul.f32 %v775, 0.2
  %v810 = vmax.f32 %v620, %v778
  %v811 = vmax.f32 %v625, %v779
  %v812 = vmax.f32 %v630, %v780
  %v813 = vmax.f32 %v635, %v781
  %v814 = vmax.f32 %v640, %v782
  %v815 = vmax.f32 %v645, %v783
  %v816 = vmax.f32 %v650, %v784
  %v817 = vmax.f32 %v655, %v785
  %v818 = vmax.f32 %v660, %v786
  %v819 = vmax.f32 %v665, %v787
  %v820 = vmax.f32 %v670, %v788
  %v821 = vmax.f32 %v675, %v789
  %v822 = vmax.f32 %v680, %v790
  %v823 = vmax.f32 %v685, %v791
  %v824 = vmax.f32 %v690, %v792
  %v825 = vmax.f32 %v695, %v793
  %v826 = vmax.f32 %v700, %v794
  %v827 = vmax.f32 %v705, %v795
  %v828 = vmax.f32 %v710, %v796
  %v829 = vmax.f32 %v715, %v797
  %v830 = vmax.f32 %v720, %v798
  %v831 = vmax.f32 %v725, %v799
  %v832 = vmax.f32 %v730, %v800
  %v833 = vmax.f32 %v735, %v801
  %v834 = vmax.f32 %v740, %v802
  %v835 = vmax.f32 %v745, %v803
  %v836 = vmax.f32 %v750, %v804
  %v837 = vmax.f32 %v755, %v805
  %v838 = vmax.f32 %v760, %v806
  %v839 = vmax.f32 %v765, %v807
  %v840 = vmax.f32 %v770, %v808
  %v841 = vmax.f32 %v775, %v809
  %v842 = vld [vmem:[%s1] sm:$0xff]
  %v843 = vld [vmem:[%s1 + $0x8] sm:$0xff]
  %v844 = vld [vmem:[%s1 + $0x10] sm:$0xff]
  %v845 = vld [vmem:[%s1 + $0x18] sm:$0xff]
  %v846 = vld [vmem:[%s1 + $0x20] sm:$0xff]
  %v847 = vld [vmem:[%s1 + $0x28] sm:$0xff]
  %v848 = vld [vmem:[%s1 + $0x30] sm:$0xff]
  %v849 = vld [vmem:[%s1 + $0x38] sm:$0xff]
  %v850 = vld [vmem:[%s1 + $0x40] sm:$0xff]
  %v851 = vld [vmem:[%s1 + $0x48] sm:$0xff]
  %v852 = vld [vmem:[%s1 + $0x50] sm:$0xff]
  %v853 = vld [vmem:[%s1 + $0x58] sm:$0xff]
  %v854 = vld [vmem:[%s1 + $0x60] sm:$0xff]
  %v855 = vld [vmem:[%s1 + $0x68] sm:$0xff]
  %v856 = vld [vmem:[%s1 + $0x70] sm:$0xff]
  %v857 = vld [vmem:[%s1 + $0x78] sm:$0xff]
  %v858 = vld [vmem:[%s1 + $0x80] sm:$0xff]
  %v859 = vld [vmem:[%s1 + $0x88] sm:$0xff]
  %v860 = vld [vmem:[%s1 + $0x90] sm:$0xff]
  %v861 = vld [vmem:[%s1 + $0x98] sm:$0xff]
  %v862 = vld [vmem:[%s1 + $0xa0] sm:$0xff]
  %v863 = vld [vmem:[%s1 + $0xa8] sm:$0xff]
  %v864 = vld [vmem:[%s1 + $0xb0] sm:$0xff]
  %v865 = vld [vmem:[%s1 + $0xb8] sm:$0xff]
  %v866 = vld [vmem:[%s1 + $0xc0] sm:$0xff]
  %v867 = vld [vmem:[%s1 + $0xc8] sm:$0xff]
  %v868 = vld [vmem:[%s1 + $0xd0] sm:$0xff]
  %v869 = vld [vmem:[%s1 + $0xd8] sm:$0xff]
  %v870 = vld [vmem:[%s1 + $0xe0] sm:$0xff]
  %v871 = vld [vmem:[%s1 + $0xe8] sm:$0xff]
  %v872 = vld [vmem:[%s1 + $0xf0] sm:$0xff]
  %v873 = vld [vmem:[%s1 + $0xf8] sm:$0xff]
  %v874 = vld [vmem:[%s4] sm:$0xf]
  %876 = vset.pattern.permute.xlu0 0
  %877 = vperm.xlu0 %876, %v842
  %v878 = vpop.permute.xlu0 %877
  %881 = vset.pattern.permute.xlu0 0
  %882 = vperm.xlu0 %881, %v843
  %v883 = vpop.permute.xlu0 %882
  %886 = vset.pattern.permute.xlu0 0
  %887 = vperm.xlu0 %886, %v844
  %v888 = vpop.permute.xlu0 %887
  %891 = vset.pattern.permute.xlu0 0
  %892 = vperm.xlu0 %891, %v845
  %v893 = vpop.permute.xlu0 %892
  %896 = vset.pattern.permute.xlu0 0
  %897 = vperm.xlu0 %896, %v846
  %v898 = vpop.permute.xlu0 %897
  %901 = vset.pattern.permute.xlu0 0
  %902 = vperm.xlu0 %901, %v847
  %v903 = vpop.permute.xlu0 %902
  %906 = vset.pattern.permute.xlu0 0
  %907 = vperm.xlu0 %906, %v848
  %v908 = vpop.permute.xlu0 %907
  %911 = vset.pattern.permute.xlu0 0
  %912 = vperm.xlu0 %911, %v849
  %v913 = vpop.permute.xlu0 %912
  %916 = vset.pattern.permute.xlu0 0
  %917 = vperm.xlu0 %916, %v850
  %v918 = vpop.permute.xlu0 %917
  %921 = vset.pattern.permute.xlu0 0
  %922 = vperm.xlu0 %921, %v851
  %v923 = vpop.permute.xlu0 %922
  %926 = vset.pattern.permute.xlu0 0
  %927 = vperm.xlu0 %926, %v852
  %v928 = vpop.permute.xlu0 %927
  %931 = vset.pattern.permute.xlu0 0
  %932 = vperm.xlu0 %931, %v853
  %v933 = vpop.permute.xlu0 %932
  %936 = vset.pattern.permute.xlu0 0
  %937 = vperm.xlu0 %936, %v854
  %v938 = vpop.permute.xlu0 %937
  %941 = vset.pattern.permute.xlu0 0
  %942 = vperm.xlu0 %941, %v855
  %v943 = vpop.permute.xlu0 %942
  %946 = vset.pattern.permute.xlu0 0
  %947 = vperm.xlu0 %946, %v856
  %v948 = vpop.permute.xlu0 %947
  %951 = vset.pattern.permute.xlu0 0
  %952 = vperm.xlu0 %951, %v857
  %v953 = vpop.permute.xlu0 %952
  %956 = vset.pattern.permute.xlu0 0
  %957 = vperm.xlu0 %956, %v858
  %v958 = vpop.permute.xlu0 %957
  %961 = vset.pattern.permute.xlu0 0
  %962 = vperm.xlu0 %961, %v859
  %v963 = vpop.permute.xlu0 %962
  %966 = vset.pattern.permute.xlu0 0
  %967 = vperm.xlu0 %966, %v860
  %v968 = vpop.permute.xlu0 %967
  %971 = vset.pattern.permute.xlu0 0
  %972 = vperm.xlu0 %971, %v861
  %v973 = vpop.permute.xlu0 %972
  %976 = vset.pattern.permute.xlu0 0
  %977 = vperm.xlu0 %976, %v862
  %v978 = vpop.permute.xlu0 %977
  %981 = vset.pattern.permute.xlu0 0
  %982 = vperm.xlu0 %981, %v863
  %v983 = vpop.permute.xlu0 %982
  %986 = vset.pattern.permute.xlu0 0
  %987 = vperm.xlu0 %986, %v864
  %v988 = vpop.permute.xlu0 %987
  %991 = vset.pattern.permute.xlu0 0
  %992 = vperm.xlu0 %991, %v865
  %v993 = vpop.permute.xlu0 %992
  %996 = vset.pattern.permute.xlu0 0
  %997 = vperm.xlu0 %996, %v866
  %v998 = vpop.permute.xlu0 %997
  %1001 = vset.pattern.permute.xlu0 0
  %1002 = vperm.xlu0 %1001, %v867
  %v1003 = vpop.permute.xlu0 %1002
  %1006 = vset.pattern.permute.xlu0 0
  %1007 = vperm.xlu0 %1006, %v868
  %v1008 = vpop.permute.xlu0 %1007
  %1011 = vset.pattern.permute.xlu0 0
  %1012 = vperm.xlu0 %1011, %v869
  %v1013 = vpop.permute.xlu0 %1012
  %1016 = vset.pattern.permute.xlu0 0
  %1017 = vperm.xlu0 %1016, %v870
  %v1018 = vpop.permute.xlu0 %1017
  %1021 = vset.pattern.permute.xlu0 0
  %1022 = vperm.xlu0 %1021, %v871
  %v1023 = vpop.permute.xlu0 %1022
  %1026 = vset.pattern.permute.xlu0 0
  %1027 = vperm.xlu0 %1026, %v872
  %v1028 = vpop.permute.xlu0 %1027
  %1031 = vset.pattern.permute.xlu0 0
  %1032 = vperm.xlu0 %1031, %v873
  %v1033 = vpop.permute.xlu0 %1032
  %v1035 = vlaneseq
  %v1036 = vshrl.u32 %v1035, 7
  %v1037 = vsub.s32 0, %v1036
  %v1038 = vrot.slane %v874, %v1037
  %v1039 = vmul.f32 %v878, %v1038
  %v1040 = vmul.f32 %v883, %v1038
  %v1041 = vmul.f32 %v888, %v1038
  %v1042 = vmul.f32 %v893, %v1038
  %v1043 = vmul.f32 %v898, %v1038
  %v1044 = vmul.f32 %v903, %v1038
  %v1045 = vmul.f32 %v908, %v1038
  %v1046 = vmul.f32 %v913, %v1038
  %v1047 = vmul.f32 %v918, %v1038
  %v1048 = vmul.f32 %v923, %v1038
  %v1049 = vmul.f32 %v928, %v1038
  %v1050 = vmul.f32 %v933, %v1038
  %v1051 = vmul.f32 %v938, %v1038
  %v1052 = vmul.f32 %v943, %v1038
  %v1053 = vmul.f32 %v948, %v1038
  %v1054 = vmul.f32 %v953, %v1038
  %v1055 = vmul.f32 %v958, %v1038
  %v1056 = vmul.f32 %v963, %v1038
  %v1057 = vmul.f32 %v968, %v1038
  %v1058 = vmul.f32 %v973, %v1038
  %v1059 = vmul.f32 %v978, %v1038
  %v1060 = vmul.f32 %v983, %v1038
  %v1061 = vmul.f32 %v988, %v1038
  %v1062 = vmul.f32 %v993, %v1038
  %v1063 = vmul.f32 %v998, %v1038
  %v1064 = vmul.f32 %v1003, %v1038
  %v1065 = vmul.f32 %v1008, %v1038
  %v1066 = vmul.f32 %v1013, %v1038
  %v1067 = vmul.f32 %v1018, %v1038
  %v1068 = vmul.f32 %v1023, %v1038
  %v1069 = vmul.f32 %v1028, %v1038
  %v1070 = vmul.f32 %v1033, %v1038
  %1071 = vset.pattern.permute.xlu0 1
  %1072 = vperm.xlu0 %1071, %v842
  %v1073 = vpop.permute.xlu0 %1072
  %1075 = vset.pattern.permute.xlu0 1
  %1076 = vperm.xlu0 %1075, %v843
  %v1077 = vpop.permute.xlu0 %1076
  %1079 = vset.pattern.permute.xlu0 1
  %1080 = vperm.xlu0 %1079, %v844
  %v1081 = vpop.permute.xlu0 %1080
  %1083 = vset.pattern.permute.xlu0 1
  %1084 = vperm.xlu0 %1083, %v845
  %v1085 = vpop.permute.xlu0 %1084
  %1087 = vset.pattern.permute.xlu0 1
  %1088 = vperm.xlu0 %1087, %v846
  %v1089 = vpop.permute.xlu0 %1088
  %1091 = vset.pattern.permute.xlu0 1
  %1092 = vperm.xlu0 %1091, %v847
  %v1093 = vpop.permute.xlu0 %1092
  %1095 = vset.pattern.permute.xlu0 1
  %1096 = vperm.xlu0 %1095, %v848
  %v1097 = vpop.permute.xlu0 %1096
  %1099 = vset.pattern.permute.xlu0 1
  %1100 = vperm.xlu0 %1099, %v849
  %v1101 = vpop.permute.xlu0 %1100
  %1103 = vset.pattern.permute.xlu0 1
  %1104 = vperm.xlu0 %1103, %v850
  %v1105 = vpop.permute.xlu0 %1104
  %1107 = vset.pattern.permute.xlu0 1
  %1108 = vperm.xlu0 %1107, %v851
  %v1109 = vpop.permute.xlu0 %1108
  %1111 = vset.pattern.permute.xlu0 1
  %1112 = vperm.xlu0 %1111, %v852
  %v1113 = vpop.permute.xlu0 %1112
  %1115 = vset.pattern.permute.xlu0 1
  %1116 = vperm.xlu0 %1115, %v853
  %v1117 = vpop.permute.xlu0 %1116
  %1119 = vset.pattern.permute.xlu0 1
  %1120 = vperm.xlu0 %1119, %v854
  %v1121 = vpop.permute.xlu0 %1120
  %1123 = vset.pattern.permute.xlu0 1
  %1124 = vperm.xlu0 %1123, %v855
  %v1125 = vpop.permute.xlu0 %1124
  %1127 = vset.pattern.permute.xlu0 1
  %1128 = vperm.xlu0 %1127, %v856
  %v1129 = vpop.permute.xlu0 %1128
  %1131 = vset.pattern.permute.xlu0 1
  %1132 = vperm.xlu0 %1131, %v857
  %v1133 = vpop.permute.xlu0 %1132
  %1135 = vset.pattern.permute.xlu0 1
  %1136 = vperm.xlu0 %1135, %v858
  %v1137 = vpop.permute.xlu0 %1136
  %1139 = vset.pattern.permute.xlu0 1
  %1140 = vperm.xlu0 %1139, %v859
  %v1141 = vpop.permute.xlu0 %1140
  %1143 = vset.pattern.permute.xlu0 1
  %1144 = vperm.xlu0 %1143, %v860
  %v1145 = vpop.permute.xlu0 %1144
  %1147 = vset.pattern.permute.xlu0 1
  %1148 = vperm.xlu0 %1147, %v861
  %v1149 = vpop.permute.xlu0 %1148
  %1151 = vset.pattern.permute.xlu0 1
  %1152 = vperm.xlu0 %1151, %v862
  %v1153 = vpop.permute.xlu0 %1152
  %1155 = vset.pattern.permute.xlu0 1
  %1156 = vperm.xlu0 %1155, %v863
  %v1157 = vpop.permute.xlu0 %1156
  %1159 = vset.pattern.permute.xlu0 1
  %1160 = vperm.xlu0 %1159, %v864
  %v1161 = vpop.permute.xlu0 %1160
  %1163 = vset.pattern.permute.xlu0 1
  %1164 = vperm.xlu0 %1163, %v865
  %v1165 = vpop.permute.xlu0 %1164
  %1167 = vset.pattern.permute.xlu0 1
  %1168 = vperm.xlu0 %1167, %v866
  %v1169 = vpop.permute.xlu0 %1168
  %1171 = vset.pattern.permute.xlu0 1
  %1172 = vperm.xlu0 %1171, %v867
  %v1173 = vpop.permute.xlu0 %1172
  %1175 = vset.pattern.permute.xlu0 1
  %1176 = vperm.xlu0 %1175, %v868
  %v1177 = vpop.permute.xlu0 %1176
  %1179 = vset.pattern.permute.xlu0 1
  %1180 = vperm.xlu0 %1179, %v869
  %v1181 = vpop.permute.xlu0 %1180
  %1183 = vset.pattern.permute.xlu0 1
  %1184 = vperm.xlu0 %1183, %v870
  %v1185 = vpop.permute.xlu0 %1184
  %1187 = vset.pattern.permute.xlu0 1
  %1188 = vperm.xlu0 %1187, %v871
  %v1189 = vpop.permute.xlu0 %1188
  %1191 = vset.pattern.permute.xlu0 1
  %1192 = vperm.xlu0 %1191, %v872
  %v1193 = vpop.permute.xlu0 %1192
  %1195 = vset.pattern.permute.xlu0 1
  %1196 = vperm.xlu0 %1195, %v873
  %v1197 = vpop.permute.xlu0 %1196
  %v1199 = vlaneseq
  %v1200 = vshrl.u32 %v1199, 7
  %v1201 = vsub.s32 1, %v1200
  %v1202 = vrot.slane %v874, %v1201
  %v1203 = vmul.f32 %v1073, %v1202
  %v1204 = vmul.f32 %v1077, %v1202
  %v1205 = vmul.f32 %v1081, %v1202
  %v1206 = vmul.f32 %v1085, %v1202
  %v1207 = vmul.f32 %v1089, %v1202
  %v1208 = vmul.f32 %v1093, %v1202
  %v1209 = vmul.f32 %v1097, %v1202
  %v1210 = vmul.f32 %v1101, %v1202
  %v1211 = vmul.f32 %v1105, %v1202
  %v1212 = vmul.f32 %v1109, %v1202
  %v1213 = vmul.f32 %v1113, %v1202
  %v1214 = vmul.f32 %v1117, %v1202
  %v1215 = vmul.f32 %v1121, %v1202
  %v1216 = vmul.f32 %v1125, %v1202
  %v1217 = vmul.f32 %v1129, %v1202
  %v1218 = vmul.f32 %v1133, %v1202
  %v1219 = vmul.f32 %v1137, %v1202
  %v1220 = vmul.f32 %v1141, %v1202
  %v1221 = vmul.f32 %v1145, %v1202
  %v1222 = vmul.f32 %v1149, %v1202
  %v1223 = vmul.f32 %v1153, %v1202
  %v1224 = vmul.f32 %v1157, %v1202
  %v1225 = vmul.f32 %v1161, %v1202
  %v1226 = vmul.f32 %v1165, %v1202
  %v1227 = vmul.f32 %v1169, %v1202
  %v1228 = vmul.f32 %v1173, %v1202
  %v1229 = vmul.f32 %v1177, %v1202
  %v1230 = vmul.f32 %v1181, %v1202
  %v1231 = vmul.f32 %v1185, %v1202
  %v1232 = vmul.f32 %v1189, %v1202
  %v1233 = vmul.f32 %v1193, %v1202
  %v1234 = vmul.f32 %v1197, %v1202
  %v1235 = vadd.f32 %v1039, %v1203
  %v1236 = vadd.f32 %v1040, %v1204
  %v1237 = vadd.f32 %v1041, %v1205
  %v1238 = vadd.f32 %v1042, %v1206
  %v1239 = vadd.f32 %v1043, %v1207
  %v1240 = vadd.f32 %v1044, %v1208
  %v1241 = vadd.f32 %v1045, %v1209
  %v1242 = vadd.f32 %v1046, %v1210
  %v1243 = vadd.f32 %v1047, %v1211
  %v1244 = vadd.f32 %v1048, %v1212
  %v1245 = vadd.f32 %v1049, %v1213
  %v1246 = vadd.f32 %v1050, %v1214
  %v1247 = vadd.f32 %v1051, %v1215
  %v1248 = vadd.f32 %v1052, %v1216
  %v1249 = vadd.f32 %v1053, %v1217
  %v1250 = vadd.f32 %v1054, %v1218
  %v1251 = vadd.f32 %v1055, %v1219
  %v1252 = vadd.f32 %v1056, %v1220
  %v1253 = vadd.f32 %v1057, %v1221
  %v1254 = vadd.f32 %v1058, %v1222
  %v1255 = vadd.f32 %v1059, %v1223
  %v1256 = vadd.f32 %v1060, %v1224
  %v1257 = vadd.f32 %v1061, %v1225
  %v1258 = vadd.f32 %v1062, %v1226
  %v1259 = vadd.f32 %v1063, %v1227
  %v1260 = vadd.f32 %v1064, %v1228
  %v1261 = vadd.f32 %v1065, %v1229
  %v1262 = vadd.f32 %v1066, %v1230
  %v1263 = vadd.f32 %v1067, %v1231
  %v1264 = vadd.f32 %v1068, %v1232
  %v1265 = vadd.f32 %v1069, %v1233
  %v1266 = vadd.f32 %v1070, %v1234
  %1267 = vset.pattern.permute.xlu0 2
  %1268 = vperm.xlu0 %1267, %v842
  %v1269 = vpop.permute.xlu0 %1268
  %1271 = vset.pattern.permute.xlu0 2
  %1272 = vperm.xlu0 %1271, %v843
  %v1273 = vpop.permute.xlu0 %1272
  %1275 = vset.pattern.permute.xlu0 2
  %1276 = vperm.xlu0 %1275, %v844
  %v1277 = vpop.permute.xlu0 %1276
  %1279 = vset.pattern.permute.xlu0 2
  %1280 = vperm.xlu0 %1279, %v845
  %v1281 = vpop.permute.xlu0 %1280
  %1283 = vset.pattern.permute.xlu0 2
  %1284 = vperm.xlu0 %1283, %v846
  %v1285 = vpop.permute.xlu0 %1284
  %1287 = vset.pattern.permute.xlu0 2
  %1288 = vperm.xlu0 %1287, %v847
  %v1289 = vpop.permute.xlu0 %1288
  %1291 = vset.pattern.permute.xlu0 2
  %1292 = vperm.xlu0 %1291, %v848
  %v1293 = vpop.permute.xlu0 %1292
  %1295 = vset.pattern.permute.xlu0 2
  %1296 = vperm.xlu0 %1295, %v849
  %v1297 = vpop.permute.xlu0 %1296
  %1299 = vset.pattern.permute.xlu0 2
  %1300 = vperm.xlu0 %1299, %v850
  %v1301 = vpop.permute.xlu0 %1300
  %1303 = vset.pattern.permute.xlu0 2
  %1304 = vperm.xlu0 %1303, %v851
  %v1305 = vpop.permute.xlu0 %1304
  %1307 = vset.pattern.permute.xlu0 2
  %1308 = vperm.xlu0 %1307, %v852
  %v1309 = vpop.permute.xlu0 %1308
  %1311 = vset.pattern.permute.xlu0 2
  %1312 = vperm.xlu0 %1311, %v853
  %v1313 = vpop.permute.xlu0 %1312
  %1315 = vset.pattern.permute.xlu0 2
  %1316 = vperm.xlu0 %1315, %v854
  %v1317 = vpop.permute.xlu0 %1316
  %1319 = vset.pattern.permute.xlu0 2
  %1320 = vperm.xlu0 %1319, %v855
  %v1321 = vpop.permute.xlu0 %1320
  %1323 = vset.pattern.permute.xlu0 2
  %1324 = vperm.xlu0 %1323, %v856
  %v1325 = vpop.permute.xlu0 %1324
  %1327 = vset.pattern.permute.xlu0 2
  %1328 = vperm.xlu0 %1327, %v857
  %v1329 = vpop.permute.xlu0 %1328
  %1331 = vset.pattern.permute.xlu0 2
  %1332 = vperm.xlu0 %1331, %v858
  %v1333 = vpop.permute.xlu0 %1332
  %1335 = vset.pattern.permute.xlu0 2
  %1336 = vperm.xlu0 %1335, %v859
  %v1337 = vpop.permute.xlu0 %1336
  %1339 = vset.pattern.permute.xlu0 2
  %1340 = vperm.xlu0 %1339, %v860
  %v1341 = vpop.permute.xlu0 %1340
  %1343 = vset.pattern.permute.xlu0 2
  %1344 = vperm.xlu0 %1343, %v861
  %v1345 = vpop.permute.xlu0 %1344
  %1347 = vset.pattern.permute.xlu0 2
  %1348 = vperm.xlu0 %1347, %v862
  %v1349 = vpop.permute.xlu0 %1348
  %1351 = vset.pattern.permute.xlu0 2
  %1352 = vperm.xlu0 %1351, %v863
  %v1353 = vpop.permute.xlu0 %1352
  %1355 = vset.pattern.permute.xlu0 2
  %1356 = vperm.xlu0 %1355, %v864
  %v1357 = vpop.permute.xlu0 %1356
  %1359 = vset.pattern.permute.xlu0 2
  %1360 = vperm.xlu0 %1359, %v865
  %v1361 = vpop.permute.xlu0 %1360
  %1363 = vset.pattern.permute.xlu0 2
  %1364 = vperm.xlu0 %1363, %v866
  %v1365 = vpop.permute.xlu0 %1364
  %1367 = vset.pattern.permute.xlu0 2
  %1368 = vperm.xlu0 %1367, %v867
  %v1369 = vpop.permute.xlu0 %1368
  %1371 = vset.pattern.permute.xlu0 2
  %1372 = vperm.xlu0 %1371, %v868
  %v1373 = vpop.permute.xlu0 %1372
  %1375 = vset.pattern.permute.xlu0 2
  %1376 = vperm.xlu0 %1375, %v869
  %v1377 = vpop.permute.xlu0 %1376
  %1379 = vset.pattern.permute.xlu0 2
  %1380 = vperm.xlu0 %1379, %v870
  %v1381 = vpop.permute.xlu0 %1380
  %1383 = vset.pattern.permute.xlu0 2
  %1384 = vperm.xlu0 %1383, %v871
  %v1385 = vpop.permute.xlu0 %1384
  %1387 = vset.pattern.permute.xlu0 2
  %1388 = vperm.xlu0 %1387, %v872
  %v1389 = vpop.permute.xlu0 %1388
  %1391 = vset.pattern.permute.xlu0 2
  %1392 = vperm.xlu0 %1391, %v873
  %v1393 = vpop.permute.xlu0 %1392
  %v1395 = vlaneseq
  %v1396 = vshrl.u32 %v1395, 7
  %v1397 = vsub.s32 2, %v1396
  %v1398 = vrot.slane %v874, %v1397
  %v1399 = vmul.f32 %v1269, %v1398
  %v1400 = vmul.f32 %v1273, %v1398
  %v1401 = vmul.f32 %v1277, %v1398
  %v1402 = vmul.f32 %v1281, %v1398
  %v1403 = vmul.f32 %v1285, %v1398
  %v1404 = vmul.f32 %v1289, %v1398
  %v1405 = vmul.f32 %v1293, %v1398
  %v1406 = vmul.f32 %v1297, %v1398
  %v1407 = vmul.f32 %v1301, %v1398
  %v1408 = vmul.f32 %v1305, %v1398
  %v1409 = vmul.f32 %v1309, %v1398
  %v1410 = vmul.f32 %v1313, %v1398
  %v1411 = vmul.f32 %v1317, %v1398
  %v1412 = vmul.f32 %v1321, %v1398
  %v1413 = vmul.f32 %v1325, %v1398
  %v1414 = vmul.f32 %v1329, %v1398
  %v1415 = vmul.f32 %v1333, %v1398
  %v1416 = vmul.f32 %v1337, %v1398
  %v1417 = vmul.f32 %v1341, %v1398
  %v1418 = vmul.f32 %v1345, %v1398
  %v1419 = vmul.f32 %v1349, %v1398
  %v1420 = vmul.f32 %v1353, %v1398
  %v1421 = vmul.f32 %v1357, %v1398
  %v1422 = vmul.f32 %v1361, %v1398
  %v1423 = vmul.f32 %v1365, %v1398
  %v1424 = vmul.f32 %v1369, %v1398
  %v1425 = vmul.f32 %v1373, %v1398
  %v1426 = vmul.f32 %v1377, %v1398
  %v1427 = vmul.f32 %v1381, %v1398
  %v1428 = vmul.f32 %v1385, %v1398
  %v1429 = vmul.f32 %v1389, %v1398
  %v1430 = vmul.f32 %v1393, %v1398
  %v1431 = vadd.f32 %v1235, %v1399
  %v1432 = vadd.f32 %v1236, %v1400
  %v1433 = vadd.f32 %v1237, %v1401
  %v1434 = vadd.f32 %v1238, %v1402
  %v1435 = vadd.f32 %v1239, %v1403
  %v1436 = vadd.f32 %v1240, %v1404
  %v1437 = vadd.f32 %v1241, %v1405
  %v1438 = vadd.f32 %v1242, %v1406
  %v1439 = vadd.f32 %v1243, %v1407
  %v1440 = vadd.f32 %v1244, %v1408
  %v1441 = vadd.f32 %v1245, %v1409
  %v1442 = vadd.f32 %v1246, %v1410
  %v1443 = vadd.f32 %v1247, %v1411
  %v1444 = vadd.f32 %v1248, %v1412
  %v1445 = vadd.f32 %v1249, %v1413
  %v1446 = vadd.f32 %v1250, %v1414
  %v1447 = vadd.f32 %v1251, %v1415
  %v1448 = vadd.f32 %v1252, %v1416
  %v1449 = vadd.f32 %v1253, %v1417
  %v1450 = vadd.f32 %v1254, %v1418
  %v1451 = vadd.f32 %v1255, %v1419
  %v1452 = vadd.f32 %v1256, %v1420
  %v1453 = vadd.f32 %v1257, %v1421
  %v1454 = vadd.f32 %v1258, %v1422
  %v1455 = vadd.f32 %v1259, %v1423
  %v1456 = vadd.f32 %v1260, %v1424
  %v1457 = vadd.f32 %v1261, %v1425
  %v1458 = vadd.f32 %v1262, %v1426
  %v1459 = vadd.f32 %v1263, %v1427
  %v1460 = vadd.f32 %v1264, %v1428
  %v1461 = vadd.f32 %v1265, %v1429
  %v1462 = vadd.f32 %v1266, %v1430
  %1463 = vset.pattern.permute.xlu0 3
  %1464 = vperm.xlu0 %1463, %v842
  %v1465 = vpop.permute.xlu0 %1464
  %1467 = vset.pattern.permute.xlu0 3
  %1468 = vperm.xlu0 %1467, %v843
  %v1469 = vpop.permute.xlu0 %1468
  %1471 = vset.pattern.permute.xlu0 3
  %1472 = vperm.xlu0 %1471, %v844
  %v1473 = vpop.permute.xlu0 %1472
  %1475 = vset.pattern.permute.xlu0 3
  %1476 = vperm.xlu0 %1475, %v845
  %v1477 = vpop.permute.xlu0 %1476
  %1479 = vset.pattern.permute.xlu0 3
  %1480 = vperm.xlu0 %1479, %v846
  %v1481 = vpop.permute.xlu0 %1480
  %1483 = vset.pattern.permute.xlu0 3
  %1484 = vperm.xlu0 %1483, %v847
  %v1485 = vpop.permute.xlu0 %1484
  %1487 = vset.pattern.permute.xlu0 3
  %1488 = vperm.xlu0 %1487, %v848
  %v1489 = vpop.permute.xlu0 %1488
  %1491 = vset.pattern.permute.xlu0 3
  %1492 = vperm.xlu0 %1491, %v849
  %v1493 = vpop.permute.xlu0 %1492
  %1495 = vset.pattern.permute.xlu0 3
  %1496 = vperm.xlu0 %1495, %v850
  %v1497 = vpop.permute.xlu0 %1496
  %1499 = vset.pattern.permute.xlu0 3
  %1500 = vperm.xlu0 %1499, %v851
  %v1501 = vpop.permute.xlu0 %1500
  %1503 = vset.pattern.permute.xlu0 3
  %1504 = vperm.xlu0 %1503, %v852
  %v1505 = vpop.permute.xlu0 %1504
  %1507 = vset.pattern.permute.xlu0 3
  %1508 = vperm.xlu0 %1507, %v853
  %v1509 = vpop.permute.xlu0 %1508
  %1511 = vset.pattern.permute.xlu0 3
  %1512 = vperm.xlu0 %1511, %v854
  %v1513 = vpop.permute.xlu0 %1512
  %1515 = vset.pattern.permute.xlu0 3
  %1516 = vperm.xlu0 %1515, %v855
  %v1517 = vpop.permute.xlu0 %1516
  %1519 = vset.pattern.permute.xlu0 3
  %1520 = vperm.xlu0 %1519, %v856
  %v1521 = vpop.permute.xlu0 %1520
  %1523 = vset.pattern.permute.xlu0 3
  %1524 = vperm.xlu0 %1523, %v857
  %v1525 = vpop.permute.xlu0 %1524
  %1527 = vset.pattern.permute.xlu0 3
  %1528 = vperm.xlu0 %1527, %v858
  %v1529 = vpop.permute.xlu0 %1528
  %1531 = vset.pattern.permute.xlu0 3
  %1532 = vperm.xlu0 %1531, %v859
  %v1533 = vpop.permute.xlu0 %1532
  %1535 = vset.pattern.permute.xlu0 3
  %1536 = vperm.xlu0 %1535, %v860
  %v1537 = vpop.permute.xlu0 %1536
  %1539 = vset.pattern.permute.xlu0 3
  %1540 = vperm.xlu0 %1539, %v861
  %v1541 = vpop.permute.xlu0 %1540
  %1543 = vset.pattern.permute.xlu0 3
  %1544 = vperm.xlu0 %1543, %v862
  %v1545 = vpop.permute.xlu0 %1544
  %1547 = vset.pattern.permute.xlu0 3
  %1548 = vperm.xlu0 %1547, %v863
  %v1549 = vpop.permute.xlu0 %1548
  %1551 = vset.pattern.permute.xlu0 3
  %1552 = vperm.xlu0 %1551, %v864
  %v1553 = vpop.permute.xlu0 %1552
  %1555 = vset.pattern.permute.xlu0 3
  %1556 = vperm.xlu0 %1555, %v865
  %v1557 = vpop.permute.xlu0 %1556
  %1559 = vset.pattern.permute.xlu0 3
  %1560 = vperm.xlu0 %1559, %v866
  %v1561 = vpop.permute.xlu0 %1560
  %1563 = vset.pattern.permute.xlu0 3
  %1564 = vperm.xlu0 %1563, %v867
  %v1565 = vpop.permute.xlu0 %1564
  %1567 = vset.pattern.permute.xlu0 3
  %1568 = vperm.xlu0 %1567, %v868
  %v1569 = vpop.permute.xlu0 %1568
  %1571 = vset.pattern.permute.xlu0 3
  %1572 = vperm.xlu0 %1571, %v869
  %v1573 = vpop.permute.xlu0 %1572
  %1575 = vset.pattern.permute.xlu0 3
  %1576 = vperm.xlu0 %1575, %v870
  %v1577 = vpop.permute.xlu0 %1576
  %1579 = vset.pattern.permute.xlu0 3
  %1580 = vperm.xlu0 %1579, %v871
  %v1581 = vpop.permute.xlu0 %1580
  %1583 = vset.pattern.permute.xlu0 3
  %1584 = vperm.xlu0 %1583, %v872
  %v1585 = vpop.permute.xlu0 %1584
  %1587 = vset.pattern.permute.xlu0 3
  %1588 = vperm.xlu0 %1587, %v873
  %v1589 = vpop.permute.xlu0 %1588
  %v1591 = vlaneseq
  %v1592 = vshrl.u32 %v1591, 7
  %v1593 = vsub.s32 3, %v1592
  %v1594 = vrot.slane %v874, %v1593
  %v1595 = vmul.f32 %v1465, %v1594
  %v1596 = vmul.f32 %v1469, %v1594
  %v1597 = vmul.f32 %v1473, %v1594
  %v1598 = vmul.f32 %v1477, %v1594
  %v1599 = vmul.f32 %v1481, %v1594
  %v1600 = vmul.f32 %v1485, %v1594
  %v1601 = vmul.f32 %v1489, %v1594
  %v1602 = vmul.f32 %v1493, %v1594
  %v1603 = vmul.f32 %v1497, %v1594
  %v1604 = vmul.f32 %v1501, %v1594
  %v1605 = vmul.f32 %v1505, %v1594
  %v1606 = vmul.f32 %v1509, %v1594
  %v1607 = vmul.f32 %v1513, %v1594
  %v1608 = vmul.f32 %v1517, %v1594
  %v1609 = vmul.f32 %v1521, %v1594
  %v1610 = vmul.f32 %v1525, %v1594
  %v1611 = vmul.f32 %v1529, %v1594
  %v1612 = vmul.f32 %v1533, %v1594
  %v1613 = vmul.f32 %v1537, %v1594
  %v1614 = vmul.f32 %v1541, %v1594
  %v1615 = vmul.f32 %v1545, %v1594
  %v1616 = vmul.f32 %v1549, %v1594
  %v1617 = vmul.f32 %v1553, %v1594
  %v1618 = vmul.f32 %v1557, %v1594
  %v1619 = vmul.f32 %v1561, %v1594
  %v1620 = vmul.f32 %v1565, %v1594
  %v1621 = vmul.f32 %v1569, %v1594
  %v1622 = vmul.f32 %v1573, %v1594
  %v1623 = vmul.f32 %v1577, %v1594
  %v1624 = vmul.f32 %v1581, %v1594
  %v1625 = vmul.f32 %v1585, %v1594
  %v1626 = vmul.f32 %v1589, %v1594
  %v1627 = vadd.f32 %v1431, %v1595
  %v1628 = vadd.f32 %v1432, %v1596
  %v1629 = vadd.f32 %v1433, %v1597
  %v1630 = vadd.f32 %v1434, %v1598
  %v1631 = vadd.f32 %v1435, %v1599
  %v1632 = vadd.f32 %v1436, %v1600
  %v1633 = vadd.f32 %v1437, %v1601
  %v1634 = vadd.f32 %v1438, %v1602
  %v1635 = vadd.f32 %v1439, %v1603
  %v1636 = vadd.f32 %v1440, %v1604
  %v1637 = vadd.f32 %v1441, %v1605
  %v1638 = vadd.f32 %v1442, %v1606
  %v1639 = vadd.f32 %v1443, %v1607
  %v1640 = vadd.f32 %v1444, %v1608
  %v1641 = vadd.f32 %v1445, %v1609
  %v1642 = vadd.f32 %v1446, %v1610
  %v1643 = vadd.f32 %v1447, %v1611
  %v1644 = vadd.f32 %v1448, %v1612
  %v1645 = vadd.f32 %v1449, %v1613
  %v1646 = vadd.f32 %v1450, %v1614
  %v1647 = vadd.f32 %v1451, %v1615
  %v1648 = vadd.f32 %v1452, %v1616
  %v1649 = vadd.f32 %v1453, %v1617
  %v1650 = vadd.f32 %v1454, %v1618
  %v1651 = vadd.f32 %v1455, %v1619
  %v1652 = vadd.f32 %v1456, %v1620
  %v1653 = vadd.f32 %v1457, %v1621
  %v1654 = vadd.f32 %v1458, %v1622
  %v1655 = vadd.f32 %v1459, %v1623
  %v1656 = vadd.f32 %v1460, %v1624
  %v1657 = vadd.f32 %v1461, %v1625
  %v1658 = vadd.f32 %v1462, %v1626
  %v1659 = vmul.f32 %v810, %v1627
  %v1660 = vmul.f32 %v811, %v1628
  %v1661 = vmul.f32 %v812, %v1629
  %v1662 = vmul.f32 %v813, %v1630
  %v1663 = vmul.f32 %v814, %v1631
  %v1664 = vmul.f32 %v815, %v1632
  %v1665 = vmul.f32 %v816, %v1633
  %v1666 = vmul.f32 %v817, %v1634
  %v1667 = vmul.f32 %v818, %v1635
  %v1668 = vmul.f32 %v819, %v1636
  %v1669 = vmul.f32 %v820, %v1637
  %v1670 = vmul.f32 %v821, %v1638
  %v1671 = vmul.f32 %v822, %v1639
  %v1672 = vmul.f32 %v823, %v1640
  %v1673 = vmul.f32 %v824, %v1641
  %v1674 = vmul.f32 %v825, %v1642
  %v1675 = vmul.f32 %v826, %v1643
  %v1676 = vmul.f32 %v827, %v1644
  %v1677 = vmul.f32 %v828, %v1645
  %v1678 = vmul.f32 %v829, %v1646
  %v1679 = vmul.f32 %v830, %v1647
  %v1680 = vmul.f32 %v831, %v1648
  %v1681 = vmul.f32 %v832, %v1649
  %v1682 = vmul.f32 %v833, %v1650
  %v1683 = vmul.f32 %v834, %v1651
  %v1684 = vmul.f32 %v835, %v1652
  %v1685 = vmul.f32 %v836, %v1653
  %v1686 = vmul.f32 %v837, %v1654
  %v1687 = vmul.f32 %v838, %v1655
  %v1688 = vmul.f32 %v839, %v1656
  %v1689 = vmul.f32 %v840, %v1657
  %v1690 = vmul.f32 %v841, %v1658
  %v1691 = vld [vmem:[%s5] sm:$0xff]
  %v1692 = vld [vmem:[%s5 + $0x8] sm:$0xff]
  %vm1693 = vcmask 130048
  %v1695 = vsel %vm1693, %v1659, 0
  %v1698 = vsel %vm1693, %v1660, 0
  %v1701 = vsel %vm1693, %v1661, 0
  %v1704 = vsel %vm1693, %v1662, 0
  %v1707 = vsel %vm1693, %v1663, 0
  %v1710 = vsel %vm1693, %v1664, 0
  %v1713 = vsel %vm1693, %v1665, 0
  %v1716 = vsel %vm1693, %v1666, 0
  %v1719 = vsel %vm1693, %v1667, 0
  %v1722 = vsel %vm1693, %v1668, 0
  %v1725 = vsel %vm1693, %v1669, 0
  %v1728 = vsel %vm1693, %v1670, 0
  %v1731 = vsel %vm1693, %v1671, 0
  %v1734 = vsel %vm1693, %v1672, 0
  %v1737 = vsel %vm1693, %v1673, 0
  %v1740 = vsel %vm1693, %v1674, 0
  %v1743 = vsel %vm1693, %v1675, 0
  %v1746 = vsel %vm1693, %v1676, 0
  %v1749 = vsel %vm1693, %v1677, 0
  %v1752 = vsel %vm1693, %v1678, 0
  %v1755 = vsel %vm1693, %v1679, 0
  %v1758 = vsel %vm1693, %v1680, 0
  %v1761 = vsel %vm1693, %v1681, 0
  %v1764 = vsel %vm1693, %v1682, 0
  %v1767 = vsel %vm1693, %v1683, 0
  %v1770 = vsel %vm1693, %v1684, 0
  %v1773 = vsel %vm1693, %v1685, 0
  %v1776 = vsel %vm1693, %v1686, 0
  %v1779 = vsel %vm1693, %v1687, 0
  %v1782 = vsel %vm1693, %v1688, 0
  %v1785 = vsel %vm1693, %v1689, 0
  %v1788 = vsel %vm1693, %v1690, 0
  %1790 = vmatprep.subr.mxu0 0.0
  %1791 = vmatpush1.msra.mxu0 %v1691
  %1792 = vmatprep.subr.mxu0 0.0
  %1793 = vmatpush1.msra.mxu0 %v1692
  %1794 = vmatprep.subr.mxu0 0.0
  %1795 = vmatpush1.msra.mxu0 0.0
  %1796 = vmatprep.subr.mxu0 0.0
  %1797 = vmatpush1.msra.mxu0 0.0
  %1798 = vmatprep.subr.mxu0 0.0
  %1799 = vmatpush1.msra.mxu0 0.0
  %1800 = vmatprep.subr.mxu0 0.0
  %1801 = vmatpush1.msra.mxu0 0.0
  %1802 = vmatprep.subr.mxu0 0.0
  %1803 = vmatpush1.msra.mxu0 0.0
  %1804 = vmatprep.subr.mxu0 0.0
  %1805 = vmatpush1.msra.mxu0 0.0
  %1806 = vmatprep.subr.mxu0 0.0
  %1807 = vmatpush1.msra.mxu0 0.0
  %1808 = vmatprep.subr.mxu0 0.0
  %1809 = vmatpush1.msra.mxu0 0.0
  %1810 = vmatprep.subr.mxu0 0.0
  %1811 = vmatpush1.msra.mxu0 0.0
  %1812 = vmatprep.subr.mxu0 0.0
  %1813 = vmatpush1.msra.mxu0 0.0
  %1814 = vmatprep.subr.mxu0 0.0
  %1815 = vmatpush1.msra.mxu0 0.0
  %1816 = vmatprep.subr.mxu0 0.0
  %1817 = vmatpush1.msra.mxu0 0.0
  %1818 = vmatprep.subr.mxu0 0.0
  %1819 = vmatpush1.msra.mxu0 0.0
  %1820 = vmatprep.subr.mxu0 0.0
  %1821 = vmatpush1.msra.mxu0 0.0
  %1822 = vmatprep.subr.mxu0 0.0
  %1823 = vmatpush1.msra.mxu0 0.0
  %1824 = vmatprep.subr.mxu0 0.0
  %1825 = vmatpush1.msra.mxu0 0.0
  %1826 = vmatprep.subr.mxu0 0.0
  %1827 = vmatpush1.msra.mxu0 0.0
  %1828 = vmatprep.subr.mxu0 0.0
  %1829 = vmatpush1.msra.mxu0 0.0
  %1830 = vmatprep.subr.mxu0 0.0
  %1831 = vmatpush1.msra.mxu0 0.0
  %1832 = vmatprep.subr.mxu0 0.0
  %1833 = vmatpush1.msra.mxu0 0.0
  %1834 = vmatprep.subr.mxu0 0.0
  %1835 = vmatpush1.msra.mxu0 0.0
  %1836 = vmatprep.subr.mxu0 0.0
  %1837 = vmatpush1.msra.mxu0 0.0
  %1838 = vmatprep.subr.mxu0 0.0
  %1839 = vmatpush1.msra.mxu0 0.0
  %1840 = vmatprep.subr.mxu0 0.0
  %1841 = vmatpush1.msra.mxu0 0.0
  %1842 = vmatprep.subr.mxu0 0.0
  %1843 = vmatpush1.msra.mxu0 0.0
  %1844 = vmatprep.subr.mxu0 0.0
  %1845 = vmatpush1.msra.mxu0 0.0
  %1846 = vmatprep.subr.mxu0 0.0
  %1847 = vmatpush1.msra.mxu0 0.0
  %1848 = vmatprep.subr.mxu0 0.0
  %1849 = vmatpush1.msra.mxu0 0.0
  %1850 = vmatprep.subr.mxu0 0.0
  %1851 = vmatpush1.msra.mxu0 0.0
  %1852 = vmatprep.subr.mxu0 0.0
  %1853 = vmatpush1.msra.mxu0 0.0
  %1854 = vmatprep.mubr.f32.mxu0 0.0
  %1855 = vmatmul.mubr.f32.gmra.mrb[0].mxu0 %v1695
  %v1856 = vpop.f32.mrb[0].mxu0
  %v1857 = vadd.f32 0.0, %v1856
  %v1858 = vpop.f32.mrb[0].mxu0
  %1859 = vmatprep.mubr.f32.mxu0 0.0
  %1860 = vmatmul.mubr.f32.gmra.mrb[0].mxu0 %v1698
  %v1861 = vpop.f32.mrb[0].mxu0
  %v1862 = vadd.f32 0.0, %v1861
  %v1863 = vpop.f32.mrb[0].mxu0
  %1864 = vmatprep.mubr.f32.mxu0 0.0
  %1865 = vmatmul.mubr.f32.gmra.mrb[0].mxu0 %v1701
  %v1866 = vpop.f32.mrb[0].mxu0
  %v1867 = vadd.f32 0.0, %v1866
  %v1868 = vpop.f32.mrb[0].mxu0
  %1869 = vmatprep.mubr.f32.mxu0 0.0
  %1870 = vmatmul.mubr.f32.gmra.mrb[0].mxu0 %v1704
  %v1871 = vpop.f32.mrb[0].mxu0
  %v1872 = vadd.f32 0.0, %v1871
  %v1873 = vpop.f32.mrb[0].mxu0
  %1874 = vmatprep.mubr.f32.mxu0 0.0
  %1875 = vmatmul.mubr.f32.gmra.mrb[0].mxu0 %v1707
  %v1876 = vpop.f32.mrb[0].mxu0
  %v1877 = vadd.f32 0.0, %v1876
  %v1878 = vpop.f32.mrb[0].mxu0
  %1879 = vmatprep.mubr.f32.mxu0 0.0
  %1880 = vmatmul.mubr.f32.gmra.mrb[0].mxu0 %v1710
  %v1881 = vpop.f32.mrb[0].mxu0
  %v1882 = vadd.f32 0.0, %v1881
  %v1883 = vpop.f32.mrb[0].mxu0
  %1884 = vmatprep.mubr.f32.mxu0 0.0
  %1885 = vmatmul.mubr.f32.gmra.mrb[0].mxu0 %v1713
  %v1886 = vpop.f32.mrb[0].mxu0
  %v1887 = vadd.f32 0.0, %v1886
  %v1888 = vpop.f32.mrb[0].mxu0
  %1889 = vmatprep.mubr.f32.mxu0 0.0
  %1890 = vmatmul.mubr.f32.gmra.mrb[0].mxu0 %v1716
  %v1891 = vpop.f32.mrb[0].mxu0
  %v1892 = vadd.f32 0.0, %v1891
  %v1893 = vpop.f32.mrb[0].mxu0
  %1894 = vmatprep.mubr.f32.mxu0 0.0
  %1895 = vmatmul.mubr.f32.gmra.mrb[0].mxu0 %v1719
  %v1896 = vpop.f32.mrb[0].mxu0
  %v1897 = vadd.f32 0.0, %v1896
  %v1898 = vpop.f32.mrb[0].mxu0
  %1899 = vmatprep.mubr.f32.mxu0 0.0
  %1900 = vmatmul.mubr.f32.gmra.mrb[0].mxu0 %v1722
  %v1901 = vpop.f32.mrb[0].mxu0
  %v1902 = vadd.f32 0.0, %v1901
  %v1903 = vpop.f32.mrb[0].mxu0
  %1904 = vmatprep.mubr.f32.mxu0 0.0
  %1905 = vmatmul.mubr.f32.gmra.mrb[0].mxu0 %v1725
  %v1906 = vpop.f32.mrb[0].mxu0
  %v1907 = vadd.f32 0.0, %v1906
  %v1908 = vpop.f32.mrb[0].mxu0
  %1909 = vmatprep.mubr.f32.mxu0 0.0
  %1910 = vmatmul.mubr.f32.gmra.mrb[0].mxu0 %v1728
  %v1911 = vpop.f32.mrb[0].mxu0
  %v1912 = vadd.f32 0.0, %v1911
  %v1913 = vpop.f32.mrb[0].mxu0
  %1914 = vmatprep.mubr.f32.mxu0 0.0
  %1915 = vmatmul.mubr.f32.gmra.mrb[0].mxu0 %v1731
  %v1916 = vpop.f32.mrb[0].mxu0
  %v1917 = vadd.f32 0.0, %v1916
  %v1918 = vpop.f32.mrb[0].mxu0
  %1919 = vmatprep.mubr.f32.mxu0 0.0
  %1920 = vmatmul.mubr.f32.gmra.mrb[0].mxu0 %v1734
  %v1921 = vpop.f32.mrb[0].mxu0
  %v1922 = vadd.f32 0.0, %v1921
  %v1923 = vpop.f32.mrb[0].mxu0
  %1924 = vmatprep.mubr.f32.mxu0 0.0
  %1925 = vmatmul.mubr.f32.gmra.mrb[0].mxu0 %v1737
  %v1926 = vpop.f32.mrb[0].mxu0
  %v1927 = vadd.f32 0.0, %v1926
  %v1928 = vpop.f32.mrb[0].mxu0
  %1929 = vmatprep.mubr.f32.mxu0 0.0
  %1930 = vmatmul.mubr.f32.gmra.mrb[0].mxu0 %v1740
  %v1931 = vpop.f32.mrb[0].mxu0
  %v1932 = vadd.f32 0.0, %v1931
  %v1933 = vpop.f32.mrb[0].mxu0
  %1934 = vmatprep.mubr.f32.mxu0 0.0
  %1935 = vmatmul.mubr.f32.gmra.mrb[0].mxu0 %v1743
  %v1936 = vpop.f32.mrb[0].mxu0
  %v1937 = vadd.f32 0.0, %v1936
  %v1938 = vpop.f32.mrb[0].mxu0
  %1939 = vmatprep.mubr.f32.mxu0 0.0
  %1940 = vmatmul.mubr.f32.gmra.mrb[0].mxu0 %v1746
  %v1941 = vpop.f32.mrb[0].mxu0
  %v1942 = vadd.f32 0.0, %v1941
  %v1943 = vpop.f32.mrb[0].mxu0
  %1944 = vmatprep.mubr.f32.mxu0 0.0
  %1945 = vmatmul.mubr.f32.gmra.mrb[0].mxu0 %v1749
  %v1946 = vpop.f32.mrb[0].mxu0
  %v1947 = vadd.f32 0.0, %v1946
  %v1948 = vpop.f32.mrb[0].mxu0
  %1949 = vmatprep.mubr.f32.mxu0 0.0
  %1950 = vmatmul.mubr.f32.gmra.mrb[0].mxu0 %v1752
  %v1951 = vpop.f32.mrb[0].mxu0
  %v1952 = vadd.f32 0.0, %v1951
  %v1953 = vpop.f32.mrb[0].mxu0
  %1954 = vmatprep.mubr.f32.mxu0 0.0
  %1955 = vmatmul.mubr.f32.gmra.mrb[0].mxu0 %v1755
  %v1956 = vpop.f32.mrb[0].mxu0
  %v1957 = vadd.f32 0.0, %v1956
  %v1958 = vpop.f32.mrb[0].mxu0
  %1959 = vmatprep.mubr.f32.mxu0 0.0
  %1960 = vmatmul.mubr.f32.gmra.mrb[0].mxu0 %v1758
  %v1961 = vpop.f32.mrb[0].mxu0
  %v1962 = vadd.f32 0.0, %v1961
  %v1963 = vpop.f32.mrb[0].mxu0
  %1964 = vmatprep.mubr.f32.mxu0 0.0
  %1965 = vmatmul.mubr.f32.gmra.mrb[0].mxu0 %v1761
  %v1966 = vpop.f32.mrb[0].mxu0
  %v1967 = vadd.f32 0.0, %v1966
  %v1968 = vpop.f32.mrb[0].mxu0
  %1969 = vmatprep.mubr.f32.mxu0 0.0
  %1970 = vmatmul.mubr.f32.gmra.mrb[0].mxu0 %v1764
  %v1971 = vpop.f32.mrb[0].mxu0
  %v1972 = vadd.f32 0.0, %v1971
  %v1973 = vpop.f32.mrb[0].mxu0
  %1974 = vmatprep.mubr.f32.mxu0 0.0
  %1975 = vmatmul.mubr.f32.gmra.mrb[0].mxu0 %v1767
  %v1976 = vpop.f32.mrb[0].mxu0
  %v1977 = vadd.f32 0.0, %v1976
  %v1978 = vpop.f32.mrb[0].mxu0
  %1979 = vmatprep.mubr.f32.mxu0 0.0
  %1980 = vmatmul.mubr.f32.gmra.mrb[0].mxu0 %v1770
  %v1981 = vpop.f32.mrb[0].mxu0
  %v1982 = vadd.f32 0.0, %v1981
  %v1983 = vpop.f32.mrb[0].mxu0
  %1984 = vmatprep.mubr.f32.mxu0 0.0
  %1985 = vmatmul.mubr.f32.gmra.mrb[0].mxu0 %v1773
  %v1986 = vpop.f32.mrb[0].mxu0
  %v1987 = vadd.f32 0.0, %v1986
  %v1988 = vpop.f32.mrb[0].mxu0
  %1989 = vmatprep.mubr.f32.mxu0 0.0
  %1990 = vmatmul.mubr.f32.gmra.mrb[0].mxu0 %v1776
  %v1991 = vpop.f32.mrb[0].mxu0
  %v1992 = vadd.f32 0.0, %v1991
  %v1993 = vpop.f32.mrb[0].mxu0
  %1994 = vmatprep.mubr.f32.mxu0 0.0
  %1995 = vmatmul.mubr.f32.gmra.mrb[0].mxu0 %v1779
  %v1996 = vpop.f32.mrb[0].mxu0
  %v1997 = vadd.f32 0.0, %v1996
  %v1998 = vpop.f32.mrb[0].mxu0
  %1999 = vmatprep.mubr.f32.mxu0 0.0
  %2000 = vmatmul.mubr.f32.gmra.mrb[0].mxu0 %v1782
  %v2001 = vpop.f32.mrb[0].mxu0
  %v2002 = vadd.f32 0.0, %v2001
  %v2003 = vpop.f32.mrb[0].mxu0
  %2004 = vmatprep.mubr.f32.mxu0 0.0
  %2005 = vmatmul.mubr.f32.gmra.mrb[0].mxu0 %v1785
  %v2006 = vpop.f32.mrb[0].mxu0
  %v2007 = vadd.f32 0.0, %v2006
  %v2008 = vpop.f32.mrb[0].mxu0
  %2009 = vmatprep.mubr.f32.mxu0 0.0
  %2010 = vmatmul.mubr.f32.gmra.mrb[0].mxu0 %v1788
  %v2011 = vpop.f32.mrb[0].mxu0
  %v2012 = vadd.f32 0.0, %v2011
  %v2013 = vpop.f32.mrb[0].mxu0
  %2014 = vdwg.mxu0
  %v2015 = vmul.f32 %v1857, 0.2
  %v2016 = vmul.f32 %v1862, 0.2
  %v2017 = vmul.f32 %v1867, 0.2
  %v2018 = vmul.f32 %v1872, 0.2
  %v2019 = vmul.f32 %v1877, 0.2
  %v2020 = vmul.f32 %v1882, 0.2
  %v2021 = vmul.f32 %v1887, 0.2
  %v2022 = vmul.f32 %v1892, 0.2
  %v2023 = vmul.f32 %v1897, 0.2
  %v2024 = vmul.f32 %v1902, 0.2
  %v2025 = vmul.f32 %v1907, 0.2
  %v2026 = vmul.f32 %v1912, 0.2
  %v2027 = vmul.f32 %v1917, 0.2
  %v2028 = vmul.f32 %v1922, 0.2
  %v2029 = vmul.f32 %v1927, 0.2
  %v2030 = vmul.f32 %v1932, 0.2
  %v2031 = vmul.f32 %v1937, 0.2
  %v2032 = vmul.f32 %v1942, 0.2
  %v2033 = vmul.f32 %v1947, 0.2
  %v2034 = vmul.f32 %v1952, 0.2
  %v2035 = vmul.f32 %v1957, 0.2
  %v2036 = vmul.f32 %v1962, 0.2
  %v2037 = vmul.f32 %v1967, 0.2
  %v2038 = vmul.f32 %v1972, 0.2
  %v2039 = vmul.f32 %v1977, 0.2
  %v2040 = vmul.f32 %v1982, 0.2
  %v2041 = vmul.f32 %v1987, 0.2
  %v2042 = vmul.f32 %v1992, 0.2
  %v2043 = vmul.f32 %v1997, 0.2
  %v2044 = vmul.f32 %v2002, 0.2
  %v2045 = vmul.f32 %v2007, 0.2
  %v2046 = vmul.f32 %v2012, 0.2
  %v2047 = vmax.f32 %v1857, %v2015
  %v2048 = vmax.f32 %v1862, %v2016
  %v2049 = vmax.f32 %v1867, %v2017
  %v2050 = vmax.f32 %v1872, %v2018
  %v2051 = vmax.f32 %v1877, %v2019
  %v2052 = vmax.f32 %v1882, %v2020
  %v2053 = vmax.f32 %v1887, %v2021
  %v2054 = vmax.f32 %v1892, %v2022
  %v2055 = vmax.f32 %v1897, %v2023
  %v2056 = vmax.f32 %v1902, %v2024
  %v2057 = vmax.f32 %v1907, %v2025
  %v2058 = vmax.f32 %v1912, %v2026
  %v2059 = vmax.f32 %v1917, %v2027
  %v2060 = vmax.f32 %v1922, %v2028
  %v2061 = vmax.f32 %v1927, %v2029
  %v2062 = vmax.f32 %v1932, %v2030
  %v2063 = vmax.f32 %v1937, %v2031
  %v2064 = vmax.f32 %v1942, %v2032
  %v2065 = vmax.f32 %v1947, %v2033
  %v2066 = vmax.f32 %v1952, %v2034
  %v2067 = vmax.f32 %v1957, %v2035
  %v2068 = vmax.f32 %v1962, %v2036
  %v2069 = vmax.f32 %v1967, %v2037
  %v2070 = vmax.f32 %v1972, %v2038
  %v2071 = vmax.f32 %v1977, %v2039
  %v2072 = vmax.f32 %v1982, %v2040
  %v2073 = vmax.f32 %v1987, %v2041
  %v2074 = vmax.f32 %v1992, %v2042
  %v2075 = vmax.f32 %v1997, %v2043
  %v2076 = vmax.f32 %v2002, %v2044
  %v2077 = vmax.f32 %v2007, %v2045
  %v2078 = vmax.f32 %v2012, %v2046
  %v2079 = vld [vmem:[%s6] sm:$0xff]
  %v2080 = vld [vmem:[%s6 + $0x8] sm:$0xff]
  %v2081 = vld [vmem:[%s6 + $0x10] sm:$0xff]
  %v2082 = vld [vmem:[%s6 + $0x18] sm:$0xff]
  %v2084 = vsel %vm456, %v2047, 0
  %v2087 = vsel %vm456, %v2048, 0
  %v2090 = vsel %vm456, %v2049, 0
  %v2093 = vsel %vm456, %v2050, 0
  %v2096 = vsel %vm456, %v2051, 0
  %v2099 = vsel %vm456, %v2052, 0
  %v2102 = vsel %vm456, %v2053, 0
  %v2105 = vsel %vm456, %v2054, 0
  %v2108 = vsel %vm456, %v2055, 0
  %v2111 = vsel %vm456, %v2056, 0
  %v2114 = vsel %vm456, %v2057, 0
  %v2117 = vsel %vm456, %v2058, 0
  %v2120 = vsel %vm456, %v2059, 0
  %v2123 = vsel %vm456, %v2060, 0
  %v2126 = vsel %vm456, %v2061, 0
  %v2129 = vsel %vm456, %v2062, 0
  %v2132 = vsel %vm456, %v2063, 0
  %v2135 = vsel %vm456, %v2064, 0
  %v2138 = vsel %vm456, %v2065, 0
  %v2141 = vsel %vm456, %v2066, 0
  %v2144 = vsel %vm456, %v2067, 0
  %v2147 = vsel %vm456, %v2068, 0
  %v2150 = vsel %vm456, %v2069, 0
  %v2153 = vsel %vm456, %v2070, 0
  %v2156 = vsel %vm456, %v2071, 0
  %v2159 = vsel %vm456, %v2072, 0
  %v2162 = vsel %vm456, %v2073, 0
  %v2165 = vsel %vm456, %v2074, 0
  %v2168 = vsel %vm456, %v2075, 0
  %v2171 = vsel %vm456, %v2076, 0
  %v2174 = vsel %vm456, %v2077, 0
  %v2177 = vsel %vm456, %v2078, 0
  %2179 = vmatprep.subr.mxu0 0.0
  %2180 = vmatpush1.msra.mxu0 %v2079
  %2181 = vmatprep.subr.mxu0 0.0
  %2182 = vmatpush1.msra.mxu0 %v2080
  %2183 = vmatprep.subr.mxu0 0.0
  %2184 = vmatpush1.msra.mxu0 %v2081
  %2185 = vmatprep.subr.mxu0 0.0
  %2186 = vmatpush1.msra.mxu0 %v2082
  %2187 = vmatprep.subr.mxu0 0.0
  %2188 = vmatpush1.msra.mxu0 0.0
  %2189 = vmatprep.subr.mxu0 0.0
  %2190 = vmatpush1.msra.mxu0 0.0
  %2191 = vmatprep.subr.mxu0 0.0
  %2192 = vmatpush1.msra.mxu0 0.0
  %2193 = vmatprep.subr.mxu0 0.0
  %2194 = vmatpush1.msra.mxu0 0.0
  %2195 = vmatprep.subr.mxu0 0.0
  %2196 = vmatpush1.msra.mxu0 0.0
  %2197 = vmatprep.subr.mxu0 0.0
  %2198 = vmatpush1.msra.mxu0 0.0
  %2199 = vmatprep.subr.mxu0 0.0
  %2200 = vmatpush1.msra.mxu0 0.0
  %2201 = vmatprep.subr.mxu0 0.0
  %2202 = vmatpush1.msra.mxu0 0.0
  %2203 = vmatprep.subr.mxu0 0.0
  %2204 = vmatpush1.msra.mxu0 0.0
  %2205 = vmatprep.subr.mxu0 0.0
  %2206 = vmatpush1.msra.mxu0 0.0
  %2207 = vmatprep.subr.mxu0 0.0
  %2208 = vmatpush1.msra.mxu0 0.0
  %2209 = vmatprep.subr.mxu0 0.0
  %2210 = vmatpush1.msra.mxu0 0.0
  %2211 = vmatprep.subr.mxu0 0.0
  %2212 = vmatpush1.msra.mxu0 0.0
  %2213 = vmatprep.subr.mxu0 0.0
  %2214 = vmatpush1.msra.mxu0 0.0
  %2215 = vmatprep.subr.mxu0 0.0
  %2216 = vmatpush1.msra.mxu0 0.0
  %2217 = vmatprep.subr.mxu0 0.0
  %2218 = vmatpush1.msra.mxu0 0.0
  %2219 = vmatprep.subr.mxu0 0.0
  %2220 = vmatpush1.msra.mxu0 0.0
  %2221 = vmatprep.subr.mxu0 0.0
  %2222 = vmatpush1.msra.mxu0 0.0
  %2223 = vmatprep.subr.mxu0 0.0
  %2224 = vmatpush1.msra.mxu0 0.0
  %2225 = vmatprep.subr.mxu0 0.0
  %2226 = vmatpush1.msra.mxu0 0.0
  %2227 = vmatprep.subr.mxu0 0.0
  %2228 = vmatpush1.msra.mxu0 0.0
  %2229 = vmatprep.subr.mxu0 0.0
  %2230 = vmatpush1.msra.mxu0 0.0
  %2231 = vmatprep.subr.mxu0 0.0
  %2232 = vmatpush1.msra.mxu0 0.0
  %2233 = vmatprep.subr.mxu0 0.0
  %2234 = vmatpush1.msra.mxu0 0.0
  %2235 = vmatprep.subr.mxu0 0.0
  %2236 = vmatpush1.msra.mxu0 0.0
  %2237 = vmatprep.subr.mxu0 0.0
  %2238 = vmatpush1.msra.mxu0 0.0
  %2239 = vmatprep.subr.mxu0 0.0
  %2240 = vmatpush1.msra.mxu0 0.0
  %2241 = vmatprep.subr.mxu0 0.0
  %2242 = vmatpush1.msra.mxu0 0.0
  %2243 = vmatprep.mubr.f32.mxu0 0.0
  %2244 = vmatmul.mubr.f32.gmra.mrb[0].mxu0 %v2084
  %v2245 = vpop.f32.mrb[0].mxu0
  %v2246 = vadd.f32 0.0, %v2245
  %v2247 = vpop.f32.mrb[0].mxu0
  %2248 = vmatprep.mubr.f32.mxu0 0.0
  %2249 = vmatmul.mubr.f32.gmra.mrb[0].mxu0 %v2087
  %v2250 = vpop.f32.mrb[0].mxu0
  %v2251 = vadd.f32 0.0, %v2250
  %v2252 = vpop.f32.mrb[0].mxu0
  %2253 = vmatprep.mubr.f32.mxu0 0.0
  %2254 = vmatmul.mubr.f32.gmra.mrb[0].mxu0 %v2090
  %v2255 = vpop.f32.mrb[0].mxu0
  %v2256 = vadd.f32 0.0, %v2255
  %v2257 = vpop.f32.mrb[0].mxu0
  %2258 = vmatprep.mubr.f32.mxu0 0.0
  %2259 = vmatmul.mubr.f32.gmra.mrb[0].mxu0 %v2093
  %v2260 = vpop.f32.mrb[0].mxu0
  %v2261 = vadd.f32 0.0, %v2260
  %v2262 = vpop.f32.mrb[0].mxu0
  %2263 = vmatprep.mubr.f32.mxu0 0.0
  %2264 = vmatmul.mubr.f32.gmra.mrb[0].mxu0 %v2096
  %v2265 = vpop.f32.mrb[0].mxu0
  %v2266 = vadd.f32 0.0, %v2265
  %v2267 = vpop.f32.mrb[0].mxu0
  %2268 = vmatprep.mubr.f32.mxu0 0.0
  %2269 = vmatmul.mubr.f32.gmra.mrb[0].mxu0 %v2099
  %v2270 = vpop.f32.mrb[0].mxu0
  %v2271 = vadd.f32 0.0, %v2270
  %v2272 = vpop.f32.mrb[0].mxu0
  %2273 = vmatprep.mubr.f32.mxu0 0.0
  %2274 = vmatmul.mubr.f32.gmra.mrb[0].mxu0 %v2102
  %v2275 = vpop.f32.mrb[0].mxu0
  %v2276 = vadd.f32 0.0, %v2275
  %v2277 = vpop.f32.mrb[0].mxu0
  %2278 = vmatprep.mubr.f32.mxu0 0.0
  %2279 = vmatmul.mubr.f32.gmra.mrb[0].mxu0 %v2105
  %v2280 = vpop.f32.mrb[0].mxu0
  %v2281 = vadd.f32 0.0, %v2280
  %v2282 = vpop.f32.mrb[0].mxu0
  %2283 = vmatprep.mubr.f32.mxu0 0.0
  %2284 = vmatmul.mubr.f32.gmra.mrb[0].mxu0 %v2108
  %v2285 = vpop.f32.mrb[0].mxu0
  %v2286 = vadd.f32 0.0, %v2285
  %v2287 = vpop.f32.mrb[0].mxu0
  %2288 = vmatprep.mubr.f32.mxu0 0.0
  %2289 = vmatmul.mubr.f32.gmra.mrb[0].mxu0 %v2111
  %v2290 = vpop.f32.mrb[0].mxu0
  %v2291 = vadd.f32 0.0, %v2290
  %v2292 = vpop.f32.mrb[0].mxu0
  %2293 = vmatprep.mubr.f32.mxu0 0.0
  %2294 = vmatmul.mubr.f32.gmra.mrb[0].mxu0 %v2114
  %v2295 = vpop.f32.mrb[0].mxu0
  %v2296 = vadd.f32 0.0, %v2295
  %v2297 = vpop.f32.mrb[0].mxu0
  %2298 = vmatprep.mubr.f32.mxu0 0.0
  %2299 = vmatmul.mubr.f32.gmra.mrb[0].mxu0 %v2117
  %v2300 = vpop.f32.mrb[0].mxu0
  %v2301 = vadd.f32 0.0, %v2300
  %v2302 = vpop.f32.mrb[0].mxu0
  %2303 = vmatprep.mubr.f32.mxu0 0.0
  %2304 = vmatmul.mubr.f32.gmra.mrb[0].mxu0 %v2120
  %v2305 = vpop.f32.mrb[0].mxu0
  %v2306 = vadd.f32 0.0, %v2305
  %v2307 = vpop.f32.mrb[0].mxu0
  %2308 = vmatprep.mubr.f32.mxu0 0.0
  %2309 = vmatmul.mubr.f32.gmra.mrb[0].mxu0 %v2123
  %v2310 = vpop.f32.mrb[0].mxu0
  %v2311 = vadd.f32 0.0, %v2310
  %v2312 = vpop.f32.mrb[0].mxu0
  %2313 = vmatprep.mubr.f32.mxu0 0.0
  %2314 = vmatmul.mubr.f32.gmra.mrb[0].mxu0 %v2126
  %v2315 = vpop.f32.mrb[0].mxu0
  %v2316 = vadd.f32 0.0, %v2315
  %v2317 = vpop.f32.mrb[0].mxu0
  %2318 = vmatprep.mubr.f32.mxu0 0.0
  %2319 = vmatmul.mubr.f32.gmra.mrb[0].mxu0 %v2129
  %v2320 = vpop.f32.mrb[0].mxu0
  %v2321 = vadd.f32 0.0, %v2320
  %v2322 = vpop.f32.mrb[0].mxu0
  %2323 = vmatprep.mubr.f32.mxu0 0.0
  %2324 = vmatmul.mubr.f32.gmra.mrb[0].mxu0 %v2132
  %v2325 = vpop.f32.mrb[0].mxu0
  %v2326 = vadd.f32 0.0, %v2325
  %v2327 = vpop.f32.mrb[0].mxu0
  %2328 = vmatprep.mubr.f32.mxu0 0.0
  %2329 = vmatmul.mubr.f32.gmra.mrb[0].mxu0 %v2135
  %v2330 = vpop.f32.mrb[0].mxu0
  %v2331 = vadd.f32 0.0, %v2330
  %v2332 = vpop.f32.mrb[0].mxu0
  %2333 = vmatprep.mubr.f32.mxu0 0.0
  %2334 = vmatmul.mubr.f32.gmra.mrb[0].mxu0 %v2138
  %v2335 = vpop.f32.mrb[0].mxu0
  %v2336 = vadd.f32 0.0, %v2335
  %v2337 = vpop.f32.mrb[0].mxu0
  %2338 = vmatprep.mubr.f32.mxu0 0.0
  %2339 = vmatmul.mubr.f32.gmra.mrb[0].mxu0 %v2141
  %v2340 = vpop.f32.mrb[0].mxu0
  %v2341 = vadd.f32 0.0, %v2340
  %v2342 = vpop.f32.mrb[0].mxu0
  %2343 = vmatprep.mubr.f32.mxu0 0.0
  %2344 = vmatmul.mubr.f32.gmra.mrb[0].mxu0 %v2144
  %v2345 = vpop.f32.mrb[0].mxu0
  %v2346 = vadd.f32 0.0, %v2345
  %v2347 = vpop.f32.mrb[0].mxu0
  %2348 = vmatprep.mubr.f32.mxu0 0.0
  %2349 = vmatmul.mubr.f32.gmra.mrb[0].mxu0 %v2147
  %v2350 = vpop.f32.mrb[0].mxu0
  %v2351 = vadd.f32 0.0, %v2350
  %v2352 = vpop.f32.mrb[0].mxu0
  %2353 = vmatprep.mubr.f32.mxu0 0.0
  %2354 = vmatmul.mubr.f32.gmra.mrb[0].mxu0 %v2150
  %v2355 = vpop.f32.mrb[0].mxu0
  %v2356 = vadd.f32 0.0, %v2355
  %v2357 = vpop.f32.mrb[0].mxu0
  %2358 = vmatprep.mubr.f32.mxu0 0.0
  %2359 = vmatmul.mubr.f32.gmra.mrb[0].mxu0 %v2153
  %v2360 = vpop.f32.mrb[0].mxu0
  %v2361 = vadd.f32 0.0, %v2360
  %v2362 = vpop.f32.mrb[0].mxu0
  %2363 = vmatprep.mubr.f32.mxu0 0.0
  %2364 = vmatmul.mubr.f32.gmra.mrb[0].mxu0 %v2156
  %v2365 = vpop.f32.mrb[0].mxu0
  %v2366 = vadd.f32 0.0, %v2365
  %v2367 = vpop.f32.mrb[0].mxu0
  %2368 = vmatprep.mubr.f32.mxu0 0.0
  %2369 = vmatmul.mubr.f32.gmra.mrb[0].mxu0 %v2159
  %v2370 = vpop.f32.mrb[0].mxu0
  %v2371 = vadd.f32 0.0, %v2370
  %v2372 = vpop.f32.mrb[0].mxu0
  %2373 = vmatprep.mubr.f32.mxu0 0.0
  %2374 = vmatmul.mubr.f32.gmra.mrb[0].mxu0 %v2162
  %v2375 = vpop.f32.mrb[0].mxu0
  %v2376 = vadd.f32 0.0, %v2375
  %v2377 = vpop.f32.mrb[0].mxu0
  %2378 = vmatprep.mubr.f32.mxu0 0.0
  %2379 = vmatmul.mubr.f32.gmra.mrb[0].mxu0 %v2165
  %v2380 = vpop.f32.mrb[0].mxu0
  %v2381 = vadd.f32 0.0, %v2380
  %v2382 = vpop.f32.mrb[0].mxu0
  %2383 = vmatprep.mubr.f32.mxu0 0.0
  %2384 = vmatmul.mubr.f32.gmra.mrb[0].mxu0 %v2168
  %v2385 = vpop.f32.mrb[0].mxu0
  %v2386 = vadd.f32 0.0, %v2385
  %v2387 = vpop.f32.mrb[0].mxu0
  %2388 = vmatprep.mubr.f32.mxu0 0.0
  %2389 = vmatmul.mubr.f32.gmra.mrb[0].mxu0 %v2171
  %v2390 = vpop.f32.mrb[0].mxu0
  %v2391 = vadd.f32 0.0, %v2390
  %v2392 = vpop.f32.mrb[0].mxu0
  %2393 = vmatprep.mubr.f32.mxu0 0.0
  %2394 = vmatmul.mubr.f32.gmra.mrb[0].mxu0 %v2174
  %v2395 = vpop.f32.mrb[0].mxu0
  %v2396 = vadd.f32 0.0, %v2395
  %v2397 = vpop.f32.mrb[0].mxu0
  %2398 = vmatprep.mubr.f32.mxu0 0.0
  %2399 = vmatmul.mubr.f32.gmra.mrb[0].mxu0 %v2177
  %v2400 = vpop.f32.mrb[0].mxu0
  %v2401 = vadd.f32 0.0, %v2400
  %v2402 = vpop.f32.mrb[0].mxu0
  %2403 = vdwg.mxu0
  %v2404 = vmul.f32 %v2246, 0.2
  %v2405 = vmul.f32 %v2251, 0.2
  %v2406 = vmul.f32 %v2256, 0.2
  %v2407 = vmul.f32 %v2261, 0.2
  %v2408 = vmul.f32 %v2266, 0.2
  %v2409 = vmul.f32 %v2271, 0.2
  %v2410 = vmul.f32 %v2276, 0.2
  %v2411 = vmul.f32 %v2281, 0.2
  %v2412 = vmul.f32 %v2286, 0.2
  %v2413 = vmul.f32 %v2291, 0.2
  %v2414 = vmul.f32 %v2296, 0.2
  %v2415 = vmul.f32 %v2301, 0.2
  %v2416 = vmul.f32 %v2306, 0.2
  %v2417 = vmul.f32 %v2311, 0.2
  %v2418 = vmul.f32 %v2316, 0.2
  %v2419 = vmul.f32 %v2321, 0.2
  %v2420 = vmul.f32 %v2326, 0.2
  %v2421 = vmul.f32 %v2331, 0.2
  %v2422 = vmul.f32 %v2336, 0.2
  %v2423 = vmul.f32 %v2341, 0.2
  %v2424 = vmul.f32 %v2346, 0.2
  %v2425 = vmul.f32 %v2351, 0.2
  %v2426 = vmul.f32 %v2356, 0.2
  %v2427 = vmul.f32 %v2361, 0.2
  %v2428 = vmul.f32 %v2366, 0.2
  %v2429 = vmul.f32 %v2371, 0.2
  %v2430 = vmul.f32 %v2376, 0.2
  %v2431 = vmul.f32 %v2381, 0.2
  %v2432 = vmul.f32 %v2386, 0.2
  %v2433 = vmul.f32 %v2391, 0.2
  %v2434 = vmul.f32 %v2396, 0.2
  %v2435 = vmul.f32 %v2401, 0.2
  %v2436 = vmax.f32 %v2246, %v2404
  %v2437 = vmax.f32 %v2251, %v2405
  %v2438 = vmax.f32 %v2256, %v2406
  %v2439 = vmax.f32 %v2261, %v2407
  %v2440 = vmax.f32 %v2266, %v2408
  %v2441 = vmax.f32 %v2271, %v2409
  %v2442 = vmax.f32 %v2276, %v2410
  %v2443 = vmax.f32 %v2281, %v2411
  %v2444 = vmax.f32 %v2286, %v2412
  %v2445 = vmax.f32 %v2291, %v2413
  %v2446 = vmax.f32 %v2296, %v2414
  %v2447 = vmax.f32 %v2301, %v2415
  %v2448 = vmax.f32 %v2306, %v2416
  %v2449 = vmax.f32 %v2311, %v2417
  %v2450 = vmax.f32 %v2316, %v2418
  %v2451 = vmax.f32 %v2321, %v2419
  %v2452 = vmax.f32 %v2326, %v2420
  %v2453 = vmax.f32 %v2331, %v2421
  %v2454 = vmax.f32 %v2336, %v2422
  %v2455 = vmax.f32 %v2341, %v2423
  %v2456 = vmax.f32 %v2346, %v2424
  %v2457 = vmax.f32 %v2351, %v2425
  %v2458 = vmax.f32 %v2356, %v2426
  %v2459 = vmax.f32 %v2361, %v2427
  %v2460 = vmax.f32 %v2366, %v2428
  %v2461 = vmax.f32 %v2371, %v2429
  %v2462 = vmax.f32 %v2376, %v2430
  %v2463 = vmax.f32 %v2381, %v2431
  %v2464 = vmax.f32 %v2386, %v2432
  %v2465 = vmax.f32 %v2391, %v2433
  %v2466 = vmax.f32 %v2396, %v2434
  %v2467 = vmax.f32 %v2401, %v2435
  %2468 = vst.msk [vmem:[%s7] sm:$0xff] %vm66, %v2436
  %2469 = vst.msk [vmem:[%s7 + $0x8] sm:$0xff] %vm66, %v2437
  %2470 = vst.msk [vmem:[%s7 + $0x10] sm:$0xff] %vm66, %v2438
  %2471 = vst.msk [vmem:[%s7 + $0x18] sm:$0xff] %vm66, %v2439
  %2472 = vst.msk [vmem:[%s7 + $0x20] sm:$0xff] %vm66, %v2440
  %2473 = vst.msk [vmem:[%s7 + $0x28] sm:$0xff] %vm66, %v2441
  %2474 = vst.msk [vmem:[%s7 + $0x30] sm:$0xff] %vm66, %v2442
  %2475 = vst.msk [vmem:[%s7 + $0x38] sm:$0xff] %vm66, %v2443
  %2476 = vst.msk [vmem:[%s7 + $0x40] sm:$0xff] %vm66, %v2444
  %2477 = vst.msk [vmem:[%s7 + $0x48] sm:$0xff] %vm66, %v2445
  %2478 = vst.msk [vmem:[%s7 + $0x50] sm:$0xff] %vm66, %v2446
  %2479 = vst.msk [vmem:[%s7 + $0x58] sm:$0xff] %vm66, %v2447
  %2480 = vst.msk [vmem:[%s7 + $0x60] sm:$0xff] %vm66, %v2448
  %2481 = vst.msk [vmem:[%s7 + $0x68] sm:$0xff] %vm66, %v2449
  %2482 = vst.msk [vmem:[%s7 + $0x70] sm:$0xff] %vm66, %v2450
  %2483 = vst.msk [vmem:[%s7 + $0x78] sm:$0xff] %vm66, %v2451
  %2484 = vst.msk [vmem:[%s7 + $0x80] sm:$0xff] %vm66, %v2452
  %2485 = vst.msk [vmem:[%s7 + $0x88] sm:$0xff] %vm66, %v2453
  %2486 = vst.msk [vmem:[%s7 + $0x90] sm:$0xff] %vm66, %v2454
  %2487 = vst.msk [vmem:[%s7 + $0x98] sm:$0xff] %vm66, %v2455
  %2488 = vst.msk [vmem:[%s7 + $0xa0] sm:$0xff] %vm66, %v2456
  %2489 = vst.msk [vmem:[%s7 + $0xa8] sm:$0xff] %vm66, %v2457
  %2490 = vst.msk [vmem:[%s7 + $0xb0] sm:$0xff] %vm66, %v2458
  %2491 = vst.msk [vmem:[%s7 + $0xb8] sm:$0xff] %vm66, %v2459
  %2492 = vst.msk [vmem:[%s7 + $0xc0] sm:$0xff] %vm66, %v2460
  %2493 = vst.msk [vmem:[%s7 + $0xc8] sm:$0xff] %vm66, %v2461
  %2494 = vst.msk [vmem:[%s7 + $0xd0] sm:$0xff] %vm66, %v2462
  %2495 = vst.msk [vmem:[%s7 + $0xd8] sm:$0xff] %vm66, %v2463
  %2496 = vst.msk [vmem:[%s7 + $0xe0] sm:$0xff] %vm66, %v2464
  %2497 = vst.msk [vmem:[%s7 + $0xe8] sm:$0xff] %vm66, %v2465
  %2498 = vst.msk [vmem:[%s7 + $0xf0] sm:$0xff] %vm66, %v2466
  %2499 = vst.msk [vmem:[%s7 + $0xf8] sm:$0xff] %vm66, %v2467
  // Predicated region
  $region30: #{tpu_custom_call.1} parent=0 // pred_check
    _
  $region31: #{tpu_custom_call.1} parent=0 // pred_check_branch
    %2501 = sbr.rel (0) target = $region33
  $region32: #{tpu_custom_call.1} parent=0 // pred_region
    _
  $region33: #{tpu_custom_call.1} parent=0 // pred_fallthru
    _
  // Predicated region
  $region34: #{tpu_custom_call.1} parent=0 // pred_check
    _
  $region35: #{tpu_custom_call.1} parent=0 // pred_check_branch
    %2503 = sbr.rel (0) target = $region37
  $region36: #{tpu_custom_call.1} parent=0 // pred_region
    _
  $region37: #{tpu_custom_call.1} parent=0 // pred_fallthru
    _

</llo_original>
